<compile_context>
chip_gen: v7x
topology: tpu7x:2x2x1
jax: 0.10.0
libtpu: 0.0.40
codegen_flags: <defaults>
</compile_context>

<pallas_src>
import jax
import jax.numpy as jnp
from jax.experimental import pallas as pl
from jax.experimental.pallas import tpu as pltpu


IN_DIM = 28 * 28   # 784
H1 = 256
H2 = 128
LANE = 128         # TPU lane width; also the padded latent size


def _round_up(x, m):
    return ((x + m - 1) // m) * m


def _vae_kernel(
    x_ref,             # [TB, 784]  f32
    eps_ref,           # [TB, 128]  f32 (lanes [0, L) real, rest zero)
    w1_ref, b1_ref,    # [784, 256] bf16, [1, 256] f32
    w2_ref, b2_ref,    # [256, 128] bf16, [1, 128] f32
    wmv_ref, bmv_ref,  # [128, 256] bf16, [1, 256] f32  (mean | logvar, lane-padded)
    w3_ref, b3_ref,    # [128, 256] bf16, [1, 256] f32  (K padded to 128)
    w4_ref, b4_ref,    # [256, 784] bf16, [1, 784] f32
    zstats_ref,        # out [TB, 256] f32  (mean in [:, :128], logvar in [:, 128:])
    dec_ref,           # out [TB, 784] f32
):
    x = x_ref[...].astype(jnp.bfloat16)

    # ---- encoder ----
    h1 = jnp.dot(x, w1_ref[...], preferred_element_type=jnp.float32) + b1_ref[...]
    h1 = jnp.maximum(h1, 0.0).astype(jnp.bfloat16)              # ReLU
    h2 = jnp.dot(h1, w2_ref[...], preferred_element_type=jnp.float32) + b2_ref[...]

    # fused, lane-padded mean/logvar head: one matmul, one full-width store
    zstats = (jnp.dot(h2.astype(jnp.bfloat16), wmv_ref[...],
                      preferred_element_type=jnp.float32) + bmv_ref[...])
    z_mean = zstats[:, :LANE]      # vreg-boundary slices: no cross-lane shifts
    z_logvar = zstats[:, LANE:]

    # ---- reparameterization: z = mean + eps * exp(logvar / 2) ----
    z = z_mean + eps_ref[...] * jnp.exp(z_logvar * 0.5)

    # ---- decoder ----
    d1 = (jnp.dot(z.astype(jnp.bfloat16), w3_ref[...],
                  preferred_element_type=jnp.float32) + b3_ref[...])
    d1 = jnp.maximum(d1, 0.0).astype(jnp.bfloat16)              # ReLU
    dec = jnp.dot(d1, w4_ref[...], preferred_element_type=jnp.float32) + b4_ref[...]

    zstats_ref[...] = zstats.astype(zstats_ref.dtype)
    dec_ref[...] = dec.astype(dec_ref.dtype)


def prepare_params(params):
    """One-time conversion from PyTorch layout (W: [out, in], b: [out]) to the
    kernel layout: W -> [in, out] bf16, b -> [1, out] f32, with the mean/logvar
    heads fused + zero-padded to 128-lane boundaries and the decoder's latent
    input dim zero-padded to 128.  Do this OUTSIDE the per-step hot path."""
    L = params["wm"].shape[0]
    assert L <= LANE, "latent_dim > 128 not supported by this kernel layout"

    def wt(w):
        return jnp.transpose(jnp.asarray(w, jnp.float32)).astype(jnp.bfloat16)

    def bt(b):
        return jnp.asarray(b, jnp.float32).reshape(1, -1)

    # fused head: [128, 256]; mean -> cols [0, L), logvar -> cols [128, 128+L)
    wmv = jnp.zeros((H2, 2 * LANE), jnp.float32)
    wmv = wmv.at[:, :L].set(jnp.transpose(jnp.asarray(params["wm"], jnp.float32)))
    wmv = wmv.at[:, LANE:LANE + L].set(
        jnp.transpose(jnp.asarray(params["wv"], jnp.float32)))
    bmv = jnp.zeros((1, 2 * LANE), jnp.float32)
    bmv = bmv.at[0, :L].set(jnp.asarray(params["bm"], jnp.float32))
    bmv = bmv.at[0, LANE:LANE + L].set(jnp.asarray(params["bv"], jnp.float32))

    # decoder layer 1: pad K (latent) to 128 with zero rows
    w3 = jnp.zeros((LANE, H1), jnp.float32)
    w3 = w3.at[:L, :].set(jnp.transpose(jnp.asarray(params["w3"], jnp.float32)))

    return dict(
        w1=wt(params["w1"]), b1=bt(params["b1"]),
        w2=wt(params["w2"]), b2=bt(params["b2"]),
        wmv=wmv.astype(jnp.bfloat16), bmv=bmv,
        w3=w3.astype(jnp.bfloat16), b3=bt(params["b3"]),
        w4=wt(params["w4"]), b4=bt(params["b4"]),
    )


@jax.jit
def vae_forward(x, kparams, eps):
    """x: [B, 784] f32; kparams: output of prepare_params(); eps: [B, L] f32
    uniform [0,1) noise (matches torch.rand_like).
    Returns (z_mean [B,L], z_logvar [B,L], dec [B,784]), all f32."""
    B = x.shape[0]
    L = eps.shape[1]

    # Adaptive batch tile: padding stays < one sublane group, and for B >= 256
    # we guarantee >= 2 grid steps so v7x's two TensorCores share the batch.
    MAX_TB = 512
    n_steps = max(2, pl.cdiv(B, MAX_TB)) if B >= 256 else 1
    TB = _round_up(pl.cdiv(B, n_steps), 8)
    Bp = _round_up(B, TB)
    grid = (Bp // TB,)

    if Bp != B:
        x = jnp.pad(x, ((0, Bp - B), (0, 0)))
    # zero-pad eps to [Bp, 128] so the eps load is lane-dense
    eps_p = jnp.pad(eps, ((0, Bp - B), (0, LANE - L)))

    def act_spec(feat):
        return pl.BlockSpec((TB, feat), lambda i: (i, 0))

    def w_spec(shape):
        return pl.BlockSpec(shape, lambda i: (0, 0))   # VMEM-resident constants

    in_specs = [
        act_spec(IN_DIM),                               # x
        act_spec(LANE),                                 # eps (padded)
        w_spec((IN_DIM, H1)),   w_spec((1, H1)),        # w1, b1
        w_spec((H1, H2)),       w_spec((1, H2)),        # w2, b2
        w_spec((H2, 2 * LANE)), w_spec((1, 2 * LANE)),  # wmv, bmv
        w_spec((LANE, H1)),     w_spec((1, H1)),        # w3, b3
        w_spec((H1, IN_DIM)),   w_spec((1, IN_DIM)),    # w4, b4
    ]
    out_specs = [act_spec(2 * LANE), act_spec(IN_DIM)]
    out_shapes = (
        jax.ShapeDtypeStruct((Bp, 2 * LANE), jnp.float32),   # zstats (mean|logvar)
        jax.ShapeDtypeStruct((Bp, IN_DIM), jnp.float32),     # decoder out
    )

    # VMEM budget (bf16 weights, f32 biases, double-buffered activation tiles).
    w_bytes = 2 * (IN_DIM * H1 + H1 * H2 + H2 * 2 * LANE + LANE * H1 + H1 * IN_DIM)
    b_bytes = 4 * (H1 + H2 + 2 * LANE + H1 + IN_DIM)
    tile_io_bytes = 4 * TB * (IN_DIM + LANE + 2 * LANE + IN_DIM)
    vmem_limit = w_bytes + b_bytes + 4 * tile_io_bytes + (8 << 20)
    vmem_limit = int(min(max(vmem_limit, 16 << 20), 48 << 20))

    flops = 2 * Bp * (IN_DIM * H1 + H1 * H2 + H2 * 2 * LANE + LANE * H1 + H1 * IN_DIM)
    bytes_accessed = (w_bytes + b_bytes
                      + 4 * Bp * (IN_DIM + LANE + 2 * LANE + IN_DIM))

    zstats, dec = pl.pallas_call(
        _vae_kernel,
        out_shape=out_shapes,
        grid_spec=pltpu.PrefetchScalarGridSpec(
            num_scalar_prefetch=0,
            grid=grid,
            in_specs=in_specs,
            out_specs=out_specs,
        ),
        compiler_params=pltpu.CompilerParams(
            dimension_semantics=("parallel",),
            vmem_limit_bytes=vmem_limit,
        ),
        cost_estimate=pl.CostEstimate(
            flops=int(flops),
            transcendentals=int(Bp * LANE),
            bytes_accessed=int(bytes_accessed),
        ),
    )(
        x, eps_p,
        kparams["w1"], kparams["b1"],
        kparams["w2"], kparams["b2"],
        kparams["wmv"], kparams["bmv"],
        kparams["w3"], kparams["b3"],
        kparams["w4"], kparams["b4"],
    )

    z_mean = zstats[:B, :L]
    z_logvar = zstats[:B, LANE:LANE + L]
    return z_mean, z_logvar, dec[:B]


def init_params(key, latent_dim):
    """Deterministic parameter init matching the nn.Module shapes
    (PyTorch Linear layout: W is [out_features, in_features])."""
    keys = jax.random.split(key, 12)

    def lin(kw, kb, out_f, in_f):
        bound = 1.0 / jnp.sqrt(in_f)
        w = jax.random.uniform(kw, (out_f, in_f), jnp.float32, -bound, bound)
        b = jax.random.uniform(kb, (out_f,), jnp.float32, -bound, bound)
        return w, b

    w1, b1 = lin(keys[0], keys[1], H1, IN_DIM)       # 784 -> 256
    w2, b2 = lin(keys[2], keys[3], H2, H1)           # 256 -> 128
    wm, bm = lin(keys[4], keys[5], latent_dim, H2)   # 128 -> latent
    wv, bv = lin(keys[6], keys[7], latent_dim, H2)   # 128 -> latent
    w3, b3 = lin(keys[8], keys[9], H1, latent_dim)   # latent -> 256
    w4, b4 = lin(keys[10], keys[11], IN_DIM, H1)     # 256 -> 784

    return dict(w1=w1, b1=b1, w2=w2, b2=b2, wm=wm, bm=bm,
                wv=wv, bv=bv, w3=w3, b3=b3, w4=w4, b4=b4)


def vae_forward_ref(x, params, eps):
    """Plain-JAX f32 reference (mirrors the PyTorch forward exactly)."""
    h = jnp.maximum(x @ params["w1"].T + params["b1"], 0.0)
    h = h @ params["w2"].T + params["b2"]
    z_mean = h @ params["wm"].T + params["bm"]
    z_logvar = h @ params["wv"].T + params["bv"]
    z = z_mean + eps * jnp.exp(z_logvar / 2.0)
    d = jnp.maximum(z @ params["w3"].T + params["b3"], 0.0)
    dec = d @ params["w4"].T + params["b4"]
    return z_mean, z_logvar, dec


if __name__ == "__main__":
    key = jax.random.PRNGKey(0)
    k_param, k_x, k_eps = jax.random.split(key, 3)

    batch = 8
    latent_dim = 16

    params = init_params(k_param, latent_dim)
    kparams = prepare_params(params)   # one-time layout/dtype conversion

    x = jax.random.normal(k_x, (batch, IN_DIM), jnp.float32)
    # torch.rand_like -> uniform [0, 1)  (matches sample_z_from_distribution)
    eps = jax.random.uniform(k_eps, (batch, latent_dim), jnp.float32)

    z_mean, z_logvar, dec_out = vae_forward(x, kparams, eps)
    jax.block_until_ready((z_mean, z_logvar, dec_out))

    # sanity check vs the pure-f32 reference (tolerance loosened for the
    # bf16-weight / bf16-activation matmul path)
    zm_ref, zl_ref, dec_ref = vae_forward_ref(x, params, eps)
    assert jnp.allclose(z_mean, zm_ref, atol=5e-2, rtol=5e-2)
    assert jnp.allclose(z_logvar, zl_ref, atol=5e-2, rtol=5e-2)
    assert jnp.allclose(dec_out, dec_ref, atol=5e-2, rtol=5e-2)
    assert z_mean.shape == (batch, latent_dim)
    assert z_logvar.shape == (batch, latent_dim)
    assert dec_out.shape == (batch, IN_DIM)

    print("KERNEL_OK")
</pallas_src>

<mosaic_0001>
module attributes {stable_mosaic.version = 11 : i64} {
  func.func @_vae_kernel(%arg0: i32, %arg1: memref<8x784xf32, #tpu.memory_space<vmem>>, %arg2: memref<8x128xf32, #tpu.memory_space<vmem>>, %arg3: memref<784x256xbf16, #tpu.memory_space<vmem>>, %arg4: memref<1x256xf32, #tpu.memory_space<vmem>>, %arg5: memref<256x128xbf16, #tpu.memory_space<vmem>>, %arg6: memref<1x128xf32, #tpu.memory_space<vmem>>, %arg7: memref<128x256xbf16, #tpu.memory_space<vmem>>, %arg8: memref<1x256xf32, #tpu.memory_space<vmem>>, %arg9: memref<128x256xbf16, #tpu.memory_space<vmem>>, %arg10: memref<1x256xf32, #tpu.memory_space<vmem>>, %arg11: memref<256x784xbf16, #tpu.memory_space<vmem>>, %arg12: memref<1x784xf32, #tpu.memory_space<vmem>>, %arg13: memref<8x256xf32, #tpu.memory_space<vmem>>, %arg14: memref<8x784xf32, #tpu.memory_space<vmem>>) attributes {dimension_semantics = [#tpu.dimension_semantics<parallel>], iteration_bounds = array<i64: 1>, scalar_prefetch = 0 : i64, scratch_operands = 0 : i64, tpu.core_type = #tpu.core_type<tc>, window_params = [{transform_indices = @transform_0, window_bounds = array<i64: 8, 784>}, {transform_indices = @transform_1, window_bounds = array<i64: 8, 128>}, {pipeline_mode = #tpu.pipeline_mode<synchronous>, transform_indices = @transform_2, window_bounds = array<i64: 784, 256>}, {pipeline_mode = #tpu.pipeline_mode<synchronous>, transform_indices = @transform_3, window_bounds = array<i64: 1, 256>}, {pipeline_mode = #tpu.pipeline_mode<synchronous>, transform_indices = @transform_4, window_bounds = array<i64: 256, 128>}, {pipeline_mode = #tpu.pipeline_mode<synchronous>, transform_indices = @transform_5, window_bounds = array<i64: 1, 128>}, {pipeline_mode = #tpu.pipeline_mode<synchronous>, transform_indices = @transform_6, window_bounds = array<i64: 128, 256>}, {pipeline_mode = #tpu.pipeline_mode<synchronous>, transform_indices = @transform_7, window_bounds = array<i64: 1, 256>}, {pipeline_mode = #tpu.pipeline_mode<synchronous>, transform_indices = @transform_8, window_bounds = array<i64: 128, 256>}, {pipeline_mode = #tpu.pipeline_mode<synchronous>, transform_indices = @transform_9, window_bounds = array<i64: 1, 256>}, {pipeline_mode = #tpu.pipeline_mode<synchronous>, transform_indices = @transform_10, window_bounds = array<i64: 256, 784>}, {pipeline_mode = #tpu.pipeline_mode<synchronous>, transform_indices = @transform_11, window_bounds = array<i64: 1, 784>}, {transform_indices = @transform_12, window_bounds = array<i64: 8, 256>}, {transform_indices = @transform_13, window_bounds = array<i64: 8, 784>}]} {
    %c0 = arith.constant 0 : index
    %c0_0 = arith.constant 0 : index
    %0 = vector.load %arg1[%c0, %c0_0] : memref<8x784xf32, #tpu.memory_space<vmem>>, vector<8x784xf32>
    %1 = arith.truncf %0 : vector<8x784xf32> to vector<8x784xbf16>
    %c0_1 = arith.constant 0 : index
    %c0_2 = arith.constant 0 : index
    %2 = vector.load %arg3[%c0_1, %c0_2] : memref<784x256xbf16, #tpu.memory_space<vmem>>, vector<784x256xbf16>
    %cst = arith.constant dense<0.000000e+00> : vector<8x256xf32>
    %3 = tpu.matmul %1, %2, %cst {dimension_numbers = #tpu.dot_dimension_numbers<[1], [0], [0], [1], [0, 0, 1, 1], [], []>} : vector<8x784xbf16>, vector<784x256xbf16>, vector<8x256xf32> -> vector<8x256xf32>
    %c0_3 = arith.constant 0 : index
    %c0_4 = arith.constant 0 : index
    %4 = vector.load %arg4[%c0_3, %c0_4] : memref<1x256xf32, #tpu.memory_space<vmem>>, vector<1x256xf32>
    %5 = vector.broadcast %4 : vector<1x256xf32> to vector<8x256xf32>
    %6 = arith.addf %3, %5 : vector<8x256xf32>
    %cst_5 = arith.constant 0.000000e+00 : f32
    %7 = vector.broadcast %cst_5 : f32 to vector<8x256xf32>
    %8 = arith.maximumf %6, %7 : vector<8x256xf32>
    %9 = arith.truncf %8 : vector<8x256xf32> to vector<8x256xbf16>
    %c0_6 = arith.constant 0 : index
    %c0_7 = arith.constant 0 : index
    %10 = vector.load %arg5[%c0_6, %c0_7] : memref<256x128xbf16, #tpu.memory_space<vmem>>, vector<256x128xbf16>
    %cst_8 = arith.constant dense<0.000000e+00> : vector<8x128xf32>
    %11 = tpu.matmul %9, %10, %cst_8 {dimension_numbers = #tpu.dot_dimension_numbers<[1], [0], [0], [1], [0, 0, 1, 1], [], []>} : vector<8x256xbf16>, vector<256x128xbf16>, vector<8x128xf32> -> vector<8x128xf32>
    %c0_9 = arith.constant 0 : index
    %c0_10 = arith.constant 0 : index
    %12 = vector.load %arg6[%c0_9, %c0_10] : memref<1x128xf32, #tpu.memory_space<vmem>>, vector<1x128xf32>
    %13 = vector.broadcast %12 : vector<1x128xf32> to vector<8x128xf32>
    %14 = arith.addf %11, %13 : vector<8x128xf32>
    %15 = arith.truncf %14 : vector<8x128xf32> to vector<8x128xbf16>
    %c0_11 = arith.constant 0 : index
    %c0_12 = arith.constant 0 : index
    %16 = vector.load %arg7[%c0_11, %c0_12] : memref<128x256xbf16, #tpu.memory_space<vmem>>, vector<128x256xbf16>
    %cst_13 = arith.constant dense<0.000000e+00> : vector<8x256xf32>
    %17 = tpu.matmul %15, %16, %cst_13 {dimension_numbers = #tpu.dot_dimension_numbers<[1], [0], [0], [1], [0, 0, 1, 1], [], []>} : vector<8x128xbf16>, vector<128x256xbf16>, vector<8x256xf32> -> vector<8x256xf32>
    %c0_14 = arith.constant 0 : index
    %c0_15 = arith.constant 0 : index
    %18 = vector.load %arg8[%c0_14, %c0_15] : memref<1x256xf32, #tpu.memory_space<vmem>>, vector<1x256xf32>
    %19 = vector.broadcast %18 : vector<1x256xf32> to vector<8x256xf32>
    %20 = arith.addf %17, %19 : vector<8x256xf32>
    %21 = vector.extract_strided_slice %20 {offsets = [0, 0], sizes = [8, 128], strides = [1, 1]} : vector<8x256xf32> to vector<8x128xf32>
    %22 = vector.extract_strided_slice %20 {offsets = [0, 128], sizes = [8, 128], strides = [1, 1]} : vector<8x256xf32> to vector<8x128xf32>
    %c0_16 = arith.constant 0 : index
    %c0_17 = arith.constant 0 : index
    %23 = vector.load %arg2[%c0_16, %c0_17] : memref<8x128xf32, #tpu.memory_space<vmem>>, vector<8x128xf32>
    %cst_18 = arith.constant 5.000000e-01 : f32
    %24 = vector.broadcast %cst_18 : f32 to vector<8x128xf32>
    %25 = arith.mulf %22, %24 : vector<8x128xf32>
    %26 = math.exp %25 : vector<8x128xf32>
    %27 = arith.mulf %23, %26 : vector<8x128xf32>
    %28 = arith.addf %21, %27 : vector<8x128xf32>
    %29 = arith.truncf %28 : vector<8x128xf32> to vector<8x128xbf16>
    %c0_19 = arith.constant 0 : index
    %c0_20 = arith.constant 0 : index
    %30 = vector.load %arg9[%c0_19, %c0_20] : memref<128x256xbf16, #tpu.memory_space<vmem>>, vector<128x256xbf16>
    %cst_21 = arith.constant dense<0.000000e+00> : vector<8x256xf32>
    %31 = tpu.matmul %29, %30, %cst_21 {dimension_numbers = #tpu.dot_dimension_numbers<[1], [0], [0], [1], [0, 0, 1, 1], [], []>} : vector<8x128xbf16>, vector<128x256xbf16>, vector<8x256xf32> -> vector<8x256xf32>
    %c0_22 = arith.constant 0 : index
    %c0_23 = arith.constant 0 : index
    %32 = vector.load %arg10[%c0_22, %c0_23] : memref<1x256xf32, #tpu.memory_space<vmem>>, vector<1x256xf32>
    %33 = vector.broadcast %32 : vector<1x256xf32> to vector<8x256xf32>
    %34 = arith.addf %31, %33 : vector<8x256xf32>
    %cst_24 = arith.constant 0.000000e+00 : f32
    %35 = vector.broadcast %cst_24 : f32 to vector<8x256xf32>
    %36 = arith.maximumf %34, %35 : vector<8x256xf32>
    %37 = arith.truncf %36 : vector<8x256xf32> to vector<8x256xbf16>
    %c0_25 = arith.constant 0 : index
    %c0_26 = arith.constant 0 : index
    %38 = vector.load %arg11[%c0_25, %c0_26] : memref<256x784xbf16, #tpu.memory_space<vmem>>, vector<256x784xbf16>
    %cst_27 = arith.constant dense<0.000000e+00> : vector<8x784xf32>
    %39 = tpu.matmul %37, %38, %cst_27 {dimension_numbers = #tpu.dot_dimension_numbers<[1], [0], [0], [1], [0, 0, 1, 1], [], []>} : vector<8x256xbf16>, vector<256x784xbf16>, vector<8x784xf32> -> vector<8x784xf32>
    %c0_28 = arith.constant 0 : index
    %c0_29 = arith.constant 0 : index
    %40 = vector.load %arg12[%c0_28, %c0_29] : memref<1x784xf32, #tpu.memory_space<vmem>>, vector<1x784xf32>
    %41 = vector.broadcast %40 : vector<1x784xf32> to vector<8x784xf32>
    %42 = arith.addf %39, %41 : vector<8x784xf32>
    %c0_30 = arith.constant 0 : index
    %c0_31 = arith.constant 0 : index
    %43 = vector.load %arg13[%c0_30, %c0_31] : memref<8x256xf32, #tpu.memory_space<vmem>>, vector<8x256xf32>
    tpu.vector_store %arg13[%c0_30, %c0_31], %20 {strides = array<i32>} : memref<8x256xf32, #tpu.memory_space<vmem>>, vector<8x256xf32>,
    %c0_32 = arith.constant 0 : index
    %c0_33 = arith.constant 0 : index
    %44 = vector.load %arg14[%c0_32, %c0_33] : memref<8x784xf32, #tpu.memory_space<vmem>>, vector<8x784xf32>
    tpu.vector_store %arg14[%c0_32, %c0_33], %42 {strides = array<i32>} : memref<8x784xf32, #tpu.memory_space<vmem>>, vector<8x784xf32>,
    return
  }
  func.func @transform_0(%arg0: i32) -> (i32, i32) {
    %c0_i32 = arith.constant 0 : i32
    %c0_i32_0 = arith.constant 0 : i32
    return %arg0, %c0_i32 : i32, i32
  }
  func.func @transform_1(%arg0: i32) -> (i32, i32) {
    %c0_i32 = arith.constant 0 : i32
    %c0_i32_0 = arith.constant 0 : i32
    return %arg0, %c0_i32 : i32, i32
  }
  func.func @transform_2(%arg0: i32) -> (i32, i32) {
    %c0_i32 = arith.constant 0 : i32
    %c0_i32_0 = arith.constant 0 : i32
    %c0_i32_1 = arith.constant 0 : i32
    return %c0_i32, %c0_i32_0 : i32, i32
  }
  func.func @transform_3(%arg0: i32) -> (i32, i32) {
    %c0_i32 = arith.constant 0 : i32
    %c0_i32_0 = arith.constant 0 : i32
    %c0_i32_1 = arith.constant 0 : i32
    return %c0_i32, %c0_i32_0 : i32, i32
  }
  func.func @transform_4(%arg0: i32) -> (i32, i32) {
    %c0_i32 = arith.constant 0 : i32
    %c0_i32_0 = arith.constant 0 : i32
    %c0_i32_1 = arith.constant 0 : i32
    return %c0_i32, %c0_i32_0 : i32, i32
  }
  func.func @transform_5(%arg0: i32) -> (i32, i32) {
    %c0_i32 = arith.constant 0 : i32
    %c0_i32_0 = arith.constant 0 : i32
    %c0_i32_1 = arith.constant 0 : i32
    return %c0_i32, %c0_i32_0 : i32, i32
  }
  func.func @transform_6(%arg0: i32) -> (i32, i32) {
    %c0_i32 = arith.constant 0 : i32
    %c0_i32_0 = arith.constant 0 : i32
    %c0_i32_1 = arith.constant 0 : i32
    return %c0_i32, %c0_i32_0 : i32, i32
  }
  func.func @transform_7(%arg0: i32) -> (i32, i32) {
    %c0_i32 = arith.constant 0 : i32
    %c0_i32_0 = arith.constant 0 : i32
    %c0_i32_1 = arith.constant 0 : i32
    return %c0_i32, %c0_i32_0 : i32, i32
  }
  func.func @transform_8(%arg0: i32) -> (i32, i32) {
    %c0_i32 = arith.constant 0 : i32
    %c0_i32_0 = arith.constant 0 : i32
    %c0_i32_1 = arith.constant 0 : i32
    return %c0_i32, %c0_i32_0 : i32, i32
  }
  func.func @transform_9(%arg0: i32) -> (i32, i32) {
    %c0_i32 = arith.constant 0 : i32
    %c0_i32_0 = arith.constant 0 : i32
    %c0_i32_1 = arith.constant 0 : i32
    return %c0_i32, %c0_i32_0 : i32, i32
  }
  func.func @transform_10(%arg0: i32) -> (i32, i32) {
    %c0_i32 = arith.constant 0 : i32
    %c0_i32_0 = arith.constant 0 : i32
    %c0_i32_1 = arith.constant 0 : i32
    return %c0_i32, %c0_i32_0 : i32, i32
  }
  func.func @transform_11(%arg0: i32) -> (i32, i32) {
    %c0_i32 = arith.constant 0 : i32
    %c0_i32_0 = arith.constant 0 : i32
    %c0_i32_1 = arith.constant 0 : i32
    return %c0_i32, %c0_i32_0 : i32, i32
  }
  func.func @transform_12(%arg0: i32) -> (i32, i32) {
    %c0_i32 = arith.constant 0 : i32
    %c0_i32_0 = arith.constant 0 : i32
    return %arg0, %c0_i32 : i32, i32
  }
  func.func @transform_13(%arg0: i32) -> (i32, i32) {
    %c0_i32 = arith.constant 0 : i32
    %c0_i32_0 = arith.constant 0 : i32
    return %arg0, %c0_i32 : i32, i32
  }
}

</mosaic_0001>

<llo_original>
// kernel: vae_forward.1
$region0: #{vae_forward.1}
  #allocation0 [shape = 'u32[]', space=smem, size = 0x4, offset = 0x4, fixed_abs, tag = 'smem constant byte address 0x4 - core index']
  #allocation1 [shape = 'u32[144,128]{1,0:T(1,128)}', space=vmem, size = 0x12000, scoped, tag = 'internal scratch']
  %s0 = inlined_call_operand.vmem [shape: f32[8,784], index: 0, kind: input, shape index: {}]
  %s1 = inlined_call_operand.vmem [shape: f32[8,128], index: 1, kind: input, shape index: {}]
  %s2 = inlined_call_operand.vmem [shape: bf16[784,256], index: 2, kind: input, shape index: {}]
  %s3 = inlined_call_operand.vmem [shape: f32[1,256], index: 3, kind: input, shape index: {}]
  %s4 = inlined_call_operand.vmem [shape: bf16[256,128], index: 4, kind: input, shape index: {}]
  %s5 = inlined_call_operand.vmem [shape: f32[1,128], index: 5, kind: input, shape index: {}]
  %s6 = inlined_call_operand.vmem [shape: bf16[128,256], index: 6, kind: input, shape index: {}]
  %s7 = inlined_call_operand.vmem [shape: f32[1,256], index: 7, kind: input, shape index: {}]
  %s8 = inlined_call_operand.vmem [shape: bf16[128,256], index: 8, kind: input, shape index: {}]
  %s9 = inlined_call_operand.vmem [shape: f32[1,256], index: 9, kind: input, shape index: {}]
  %s10 = inlined_call_operand.vmem [shape: bf16[256,784], index: 10, kind: input, shape index: {}]
  %s11 = inlined_call_operand.vmem [shape: f32[1,784], index: 11, kind: input, shape index: {}]
  %s12 = inlined_call_operand.vmem [shape: f32[8,256], index: 12, kind: output, shape index: {0}]
  %s13 = inlined_call_operand.hbm [shape: f32[8,784], index: 13, kind: output, shape index: {1}]
  %14 = xla_tuple %s12, %s13
  %s15 = sld [smem:[#allocation0]]
  $region66: #{vae_forward.1} parent=0
    _
  %s17 = ssub.s32 1, %s15
  %s18 = scalar_select 0, %s17, %s15
  $region1: #{vae_forward.1} parent=0
    #allocation2 [shape = 'u8[28672]{0}', space=vmem, size = 0x7000, scoped, tag = 'output window, operand 1, single buffered']
    #allocation3 [shape = 's32[1]{0}', space=sflag, size = 0x4, scoped, tag = 'scoped memory for vae_forward.1']
    %19 = vsyncpa [#allocation3], 0
    // Predicated region
    $region2: #{vae_forward.1} parent=1 // pred_check
      _
    $region3: #{vae_forward.1} parent=1 // pred_check_branch
      %21 = sbr.rel (0) target = $region5
    $region4: #{vae_forward.1} parent=1 // pred_region
      _
    $region5: #{vae_forward.1} parent=1 // pred_fallthru
      _
    // Predicated region
    $region6: #{vae_forward.1} parent=1 // pred_check
      _
    $region7: #{vae_forward.1} parent=1 // pred_check_branch
      %23 = sbr.rel (0) target = $region9
    $region8: #{vae_forward.1} parent=1 // pred_region
      _
    $region9: #{vae_forward.1} parent=1 // pred_fallthru
      _
    // Predicated region
    $region10: #{vae_forward.1} parent=1 // pred_check
      _
    $region11: #{vae_forward.1} parent=1 // pred_check_branch
      %25 = sbr.rel (0) target = $region13
    $region12: #{vae_forward.1} parent=1 // pred_region
      _
    $region13: #{vae_forward.1} parent=1 // pred_fallthru
      _
    // Predicated region
    $region14: #{vae_forward.1} parent=1 // pred_check
      _
    $region15: #{vae_forward.1} parent=1 // pred_check_branch
      %27 = sbr.rel (0) target = $region17
    $region16: #{vae_forward.1} parent=1 // pred_region
      _
    $region17: #{vae_forward.1} parent=1 // pred_fallthru
      _
    // Predicated region
    $region18: #{vae_forward.1} parent=1 // pred_check
      _
    $region19: #{vae_forward.1} parent=1 // pred_check_branch
      %29 = sbr.rel (0) target = $region21
    $region20: #{vae_forward.1} parent=1 // pred_region
      _
    $region21: #{vae_forward.1} parent=1 // pred_fallthru
      _
    // Predicated region
    $region22: #{vae_forward.1} parent=1 // pred_check
      _
    $region23: #{vae_forward.1} parent=1 // pred_check_branch
      %31 = sbr.rel (0) target = $region25
    $region24: #{vae_forward.1} parent=1 // pred_region
      _
    $region25: #{vae_forward.1} parent=1 // pred_fallthru
      _
    // Predicated region
    $region26: #{vae_forward.1} parent=1 // pred_check
      _
    $region27: #{vae_forward.1} parent=1 // pred_check_branch
      %33 = sbr.rel (0) target = $region29
    $region28: #{vae_forward.1} parent=1 // pred_region
      _
    $region29: #{vae_forward.1} parent=1 // pred_fallthru
      _
    // Predicated region
    $region30: #{vae_forward.1} parent=1 // pred_check
      _
    $region31: #{vae_forward.1} parent=1 // pred_check_branch
      %35 = sbr.rel (0) target = $region33
    $region32: #{vae_forward.1} parent=1 // pred_region
      _
    $region33: #{vae_forward.1} parent=1 // pred_fallthru
      _
    // Predicated region
    $region34: #{vae_forward.1} parent=1 // pred_check
      _
    $region35: #{vae_forward.1} parent=1 // pred_check_branch
      %37 = sbr.rel (0) target = $region37
    $region36: #{vae_forward.1} parent=1 // pred_region
      _
    $region37: #{vae_forward.1} parent=1 // pred_fallthru
      _
    // Predicated region
    $region38: #{vae_forward.1} parent=1 // pred_check
      _
    $region39: #{vae_forward.1} parent=1 // pred_check_branch
      %39 = sbr.rel (0) target = $region41
    $region40: #{vae_forward.1} parent=1 // pred_region
      _
    $region41: #{vae_forward.1} parent=1 // pred_fallthru
      _
    // Predicated region
    $region42: #{vae_forward.1} parent=1 // pred_check
      _
    $region43: #{vae_forward.1} parent=1 // pred_check_branch
      %41 = sbr.rel (0) target = $region45
    $region44: #{vae_forward.1} parent=1 // pred_region
      _
    $region45: #{vae_forward.1} parent=1 // pred_fallthru
      _
    // Predicated region
    $region46: #{vae_forward.1} parent=1 // pred_check
      _
    $region47: #{vae_forward.1} parent=1 // pred_check_branch
      %43 = sbr.rel (0) target = $region49
    $region48: #{vae_forward.1} parent=1 // pred_region
      _
    $region49: #{vae_forward.1} parent=1 // pred_fallthru
      _
    %v45 = vld [vmem:[%s0] sm:$0xff]
    %v46 = vld [vmem:[%s0 + $0x8] sm:$0xff]
    %v47 = vld [vmem:[%s0 + $0x10] sm:$0xff]
    %v48 = vld [vmem:[%s0 + $0x18] sm:$0xff]
    %v49 = vld [vmem:[%s0 + $0x20] sm:$0xff]
    %v50 = vld [vmem:[%s0 + $0x28] sm:$0xff]
    %v51 = vld [vmem:[%s0 + $0x30] sm:$0xff]
    %v52 = vpack.c.bf16 %v45, %v45
    %v53 = vpack.c.bf16 %v46, %v46
    %v54 = vpack.c.bf16 %v47, %v47
    %v55 = vpack.c.bf16 %v48, %v48
    %v56 = vpack.c.bf16 %v49, %v49
    %v57 = vpack.c.bf16 %v50, %v50
    %v58 = vpack.c.bf16 %v51, %v51
    %v59 = vld [vmem:[%s2] sm:$0xff]
    %v60 = vld [vmem:[%s2 + $0x8] sm:$0xff]
    %v61 = vld [vmem:[%s2 + $0x10] sm:$0xff]
    %v62 = vld [vmem:[%s2 + $0x18] sm:$0xff]
    %v63 = vld [vmem:[%s2 + $0x20] sm:$0xff]
    %v64 = vld [vmem:[%s2 + $0x28] sm:$0xff]
    %v65 = vld [vmem:[%s2 + $0x30] sm:$0xff]
    %v66 = vld [vmem:[%s2 + $0x38] sm:$0xff]
    %v67 = vld [vmem:[%s2 + $0x40] sm:$0xff]
    %v68 = vld [vmem:[%s2 + $0x48] sm:$0xff]
    %v69 = vld [vmem:[%s2 + $0x50] sm:$0xff]
    %v70 = vld [vmem:[%s2 + $0x58] sm:$0xff]
    %v71 = vld [vmem:[%s2 + $0x60] sm:$0xff]
    %v72 = vld [vmem:[%s2 + $0x68] sm:$0xff]
    %v73 = vld [vmem:[%s2 + $0x70] sm:$0xff]
    %v74 = vld [vmem:[%s2 + $0x78] sm:$0xff]
    %v75 = vld [vmem:[%s2 + $0x80] sm:$0xff]
    %v76 = vld [vmem:[%s2 + $0x88] sm:$0xff]
    %v77 = vld [vmem:[%s2 + $0x90] sm:$0xff]
    %v78 = vld [vmem:[%s2 + $0x98] sm:$0xff]
    %v79 = vld [vmem:[%s2 + $0xa0] sm:$0xff]
    %v80 = vld [vmem:[%s2 + $0xa8] sm:$0xff]
    %v81 = vld [vmem:[%s2 + $0xb0] sm:$0xff]
    %v82 = vld [vmem:[%s2 + $0xb8] sm:$0xff]
    %v83 = vld [vmem:[%s2 + $0xc0] sm:$0xff]
    %v84 = vld [vmem:[%s2 + $0xc8] sm:$0xff]
    %v85 = vld [vmem:[%s2 + $0xd0] sm:$0xff]
    %v86 = vld [vmem:[%s2 + $0xd8] sm:$0xff]
    %v87 = vld [vmem:[%s2 + $0xe0] sm:$0xff]
    %v88 = vld [vmem:[%s2 + $0xe8] sm:$0xff]
    %v89 = vld [vmem:[%s2 + $0xf0] sm:$0xff]
    %v90 = vld [vmem:[%s2 + $0xf8] sm:$0xff]
    %v91 = vld [vmem:[%s2 + $0x100] sm:$0xff]
    %v92 = vld [vmem:[%s2 + $0x108] sm:$0xff]
    %v93 = vld [vmem:[%s2 + $0x110] sm:$0xff]
    %v94 = vld [vmem:[%s2 + $0x118] sm:$0xff]
    %v95 = vld [vmem:[%s2 + $0x120] sm:$0xff]
    %v96 = vld [vmem:[%s2 + $0x128] sm:$0xff]
    %v97 = vld [vmem:[%s2 + $0x130] sm:$0xff]
    %v98 = vld [vmem:[%s2 + $0x138] sm:$0xff]
    %v99 = vld [vmem:[%s2 + $0x140] sm:$0xff]
    %v100 = vld [vmem:[%s2 + $0x148] sm:$0xff]
    %v101 = vld [vmem:[%s2 + $0x150] sm:$0xff]
    %v102 = vld [vmem:[%s2 + $0x158] sm:$0xff]
    %v103 = vld [vmem:[%s2 + $0x160] sm:$0xff]
    %v104 = vld [vmem:[%s2 + $0x168] sm:$0xff]
    %v105 = vld [vmem:[%s2 + $0x170] sm:$0xff]
    %v106 = vld [vmem:[%s2 + $0x178] sm:$0xff]
    %v107 = vld [vmem:[%s2 + $0x180] sm:$0xff]
    %v108 = vld [vmem:[%s2 + $0x188] sm:$0xff]
    %v109 = vld [vmem:[%s2 + $0x190] sm:$0xff]
    %v110 = vld [vmem:[%s2 + $0x198] sm:$0xff]
    %v111 = vld [vmem:[%s2 + $0x1a0] sm:$0xff]
    %v112 = vld [vmem:[%s2 + $0x1a8] sm:$0xff]
    %v113 = vld [vmem:[%s2 + $0x1b0] sm:$0xff]
    %v114 = vld [vmem:[%s2 + $0x1b8] sm:$0xff]
    %v115 = vld [vmem:[%s2 + $0x1c0] sm:$0xff]
    %v116 = vld [vmem:[%s2 + $0x1c8] sm:$0xff]
    %v117 = vld [vmem:[%s2 + $0x1d0] sm:$0xff]
    %v118 = vld [vmem:[%s2 + $0x1d8] sm:$0xff]
    %v119 = vld [vmem:[%s2 + $0x1e0] sm:$0xff]
    %v120 = vld [vmem:[%s2 + $0x1e8] sm:$0xff]
    %v121 = vld [vmem:[%s2 + $0x1f0] sm:$0xff]
    %v122 = vld [vmem:[%s2 + $0x1f8] sm:$0xff]
    %v123 = vld [vmem:[%s2 + $0x200] sm:$0xff]
    %v124 = vld [vmem:[%s2 + $0x208] sm:$0xff]
    %v125 = vld [vmem:[%s2 + $0x210] sm:$0xff]
    %v126 = vld [vmem:[%s2 + $0x218] sm:$0xff]
    %v127 = vld [vmem:[%s2 + $0x220] sm:$0xff]
    %v128 = vld [vmem:[%s2 + $0x228] sm:$0xff]
    %v129 = vld [vmem:[%s2 + $0x230] sm:$0xff]
    %v130 = vld [vmem:[%s2 + $0x238] sm:$0xff]
    %v131 = vld [vmem:[%s2 + $0x240] sm:$0xff]
    %v132 = vld [vmem:[%s2 + $0x248] sm:$0xff]
    %v133 = vld [vmem:[%s2 + $0x250] sm:$0xff]
    %v134 = vld [vmem:[%s2 + $0x258] sm:$0xff]
    %v135 = vld [vmem:[%s2 + $0x260] sm:$0xff]
    %v136 = vld [vmem:[%s2 + $0x268] sm:$0xff]
    %v137 = vld [vmem:[%s2 + $0x270] sm:$0xff]
    %v138 = vld [vmem:[%s2 + $0x278] sm:$0xff]
    %v139 = vld [vmem:[%s2 + $0x280] sm:$0xff]
    %v140 = vld [vmem:[%s2 + $0x288] sm:$0xff]
    %v141 = vld [vmem:[%s2 + $0x290] sm:$0xff]
    %v142 = vld [vmem:[%s2 + $0x298] sm:$0xff]
    %v143 = vld [vmem:[%s2 + $0x2a0] sm:$0xff]
    %v144 = vld [vmem:[%s2 + $0x2a8] sm:$0xff]
    %v145 = vld [vmem:[%s2 + $0x2b0] sm:$0xff]
    %v146 = vld [vmem:[%s2 + $0x2b8] sm:$0xff]
    %v147 = vld [vmem:[%s2 + $0x2c0] sm:$0xff]
    %v148 = vld [vmem:[%s2 + $0x2c8] sm:$0xff]
    %v149 = vld [vmem:[%s2 + $0x2d0] sm:$0xff]
    %v150 = vld [vmem:[%s2 + $0x2d8] sm:$0xff]
    %v151 = vld [vmem:[%s2 + $0x2e0] sm:$0xff]
    %v152 = vld [vmem:[%s2 + $0x2e8] sm:$0xff]
    %v153 = vld [vmem:[%s2 + $0x2f0] sm:$0xff]
    %v154 = vld [vmem:[%s2 + $0x2f8] sm:$0xff]
    %v155 = vld [vmem:[%s2 + $0x300] sm:$0xff]
    %v156 = vld [vmem:[%s2 + $0x308] sm:$0xff]
    %v157 = vld [vmem:[%s3] sm:$0x3]
    %v159 = vlaneseq
    %v160 = vshrl.u32 %v159, 7
    %v161 = vsub.s32 0, %v160
    %v162 = vrot.slane %v157, %v161
    %v163 = vlaneseq
    %v164 = vshrl.u32 %v163, 7
    %v165 = vsub.s32 1, %v164
    %v166 = vrot.slane %v157, %v165
    %v267 = vunpack.c.l.b16 %v59
    %v268 = vunpack.c.h.b16 %v59
    %v269 = vunpack.c.l.b16 %v60
    %v270 = vunpack.c.h.b16 %v60
    %v271 = vunpack.c.l.b16 %v61
    %v272 = vunpack.c.h.b16 %v61
    %v273 = vunpack.c.l.b16 %v62
    %v274 = vunpack.c.h.b16 %v62
    %v275 = vunpack.c.l.b16 %v63
    %v276 = vunpack.c.h.b16 %v63
    %v277 = vunpack.c.l.b16 %v64
    %v278 = vunpack.c.h.b16 %v64
    %v279 = vunpack.c.l.b16 %v65
    %v280 = vunpack.c.h.b16 %v65
    %v281 = vunpack.c.l.b16 %v66
    %v282 = vunpack.c.h.b16 %v66
    %v283 = vunpack.c.l.b16 %v67
    %v284 = vunpack.c.h.b16 %v67
    %v285 = vunpack.c.l.b16 %v68
    %v286 = vunpack.c.h.b16 %v68
    %v287 = vunpack.c.l.b16 %v69
    %v288 = vunpack.c.h.b16 %v69
    %v289 = vunpack.c.l.b16 %v70
    %v290 = vunpack.c.h.b16 %v70
    %v291 = vunpack.c.l.b16 %v71
    %v292 = vunpack.c.h.b16 %v71
    %v293 = vunpack.c.l.b16 %v72
    %v294 = vunpack.c.h.b16 %v72
    %v295 = vunpack.c.l.b16 %v73
    %v296 = vunpack.c.h.b16 %v73
    %v297 = vunpack.c.l.b16 %v74
    %v298 = vunpack.c.h.b16 %v74
    %v299 = vunpack.c.l.b16 %v75
    %v300 = vunpack.c.h.b16 %v75
    %v301 = vunpack.c.l.b16 %v76
    %v302 = vunpack.c.h.b16 %v76
    %v303 = vunpack.c.l.b16 %v77
    %v304 = vunpack.c.h.b16 %v77
    %v305 = vunpack.c.l.b16 %v78
    %v306 = vunpack.c.h.b16 %v78
    %v307 = vunpack.c.l.b16 %v79
    %v308 = vunpack.c.h.b16 %v79
    %v309 = vunpack.c.l.b16 %v80
    %v310 = vunpack.c.h.b16 %v80
    %v311 = vunpack.c.l.b16 %v81
    %v312 = vunpack.c.h.b16 %v81
    %v313 = vunpack.c.l.b16 %v82
    %v314 = vunpack.c.h.b16 %v82
    %v315 = vunpack.c.l.b16 %v83
    %v316 = vunpack.c.h.b16 %v83
    %v317 = vunpack.c.l.b16 %v84
    %v318 = vunpack.c.h.b16 %v84
    %v319 = vunpack.c.l.b16 %v85
    %v320 = vunpack.c.h.b16 %v85
    %v321 = vunpack.c.l.b16 %v86
    %v322 = vunpack.c.h.b16 %v86
    %v323 = vunpack.c.l.b16 %v87
    %v324 = vunpack.c.h.b16 %v87
    %v325 = vunpack.c.l.b16 %v88
    %v326 = vunpack.c.h.b16 %v88
    %v327 = vunpack.c.l.b16 %v89
    %v328 = vunpack.c.h.b16 %v89
    %v329 = vunpack.c.l.b16 %v90
    %v330 = vunpack.c.h.b16 %v90
    %v331 = vunpack.c.l.b16 %v91
    %v332 = vunpack.c.h.b16 %v91
    %v333 = vunpack.c.l.b16 %v92
    %v334 = vunpack.c.h.b16 %v92
    %v335 = vunpack.c.l.b16 %v93
    %v336 = vunpack.c.h.b16 %v93
    %v337 = vunpack.c.l.b16 %v94
    %v338 = vunpack.c.h.b16 %v94
    %v339 = vunpack.c.l.b16 %v95
    %v340 = vunpack.c.h.b16 %v95
    %v341 = vunpack.c.l.b16 %v96
    %v342 = vunpack.c.h.b16 %v96
    %v343 = vunpack.c.l.b16 %v97
    %v344 = vunpack.c.h.b16 %v97
    %v345 = vunpack.c.l.b16 %v98
    %v346 = vunpack.c.h.b16 %v98
    %v347 = vunpack.c.l.b16 %v99
    %v348 = vunpack.c.h.b16 %v99
    %v349 = vunpack.c.l.b16 %v100
    %v350 = vunpack.c.h.b16 %v100
    %v351 = vunpack.c.l.b16 %v101
    %v352 = vunpack.c.h.b16 %v101
    %v353 = vunpack.c.l.b16 %v102
    %v354 = vunpack.c.h.b16 %v102
    %v355 = vunpack.c.l.b16 %v103
    %v356 = vunpack.c.h.b16 %v103
    %v357 = vunpack.c.l.b16 %v104
    %v358 = vunpack.c.h.b16 %v104
    %v359 = vunpack.c.l.b16 %v105
    %v360 = vunpack.c.h.b16 %v105
    %v361 = vunpack.c.l.b16 %v106
    %v362 = vunpack.c.h.b16 %v106
    %v363 = vunpack.c.l.b16 %v107
    %v364 = vunpack.c.h.b16 %v107
    %v365 = vunpack.c.l.b16 %v108
    %v366 = vunpack.c.h.b16 %v108
    %v367 = vunpack.c.l.b16 %v109
    %v368 = vunpack.c.h.b16 %v109
    %v369 = vunpack.c.l.b16 %v110
    %v370 = vunpack.c.h.b16 %v110
    %v371 = vunpack.c.l.b16 %v111
    %v372 = vunpack.c.h.b16 %v111
    %v373 = vunpack.c.l.b16 %v112
    %v374 = vunpack.c.h.b16 %v112
    %v375 = vunpack.c.l.b16 %v113
    %v376 = vunpack.c.h.b16 %v113
    %v377 = vunpack.c.l.b16 %v114
    %v378 = vunpack.c.h.b16 %v114
    %v379 = vunpack.c.l.b16 %v115
    %v380 = vunpack.c.h.b16 %v115
    %v381 = vunpack.c.l.b16 %v116
    %v382 = vunpack.c.h.b16 %v116
    %v383 = vunpack.c.l.b16 %v117
    %v384 = vunpack.c.h.b16 %v117
    %v385 = vunpack.c.l.b16 %v118
    %v386 = vunpack.c.h.b16 %v118
    %v387 = vunpack.c.l.b16 %v119
    %v388 = vunpack.c.h.b16 %v119
    %v389 = vunpack.c.l.b16 %v120
    %v390 = vunpack.c.h.b16 %v120
    %v391 = vunpack.c.l.b16 %v121
    %v392 = vunpack.c.h.b16 %v121
    %v393 = vunpack.c.l.b16 %v122
    %v394 = vunpack.c.h.b16 %v122
    %v395 = vunpack.c.l.b16 %v123
    %v396 = vunpack.c.h.b16 %v123
    %v397 = vunpack.c.l.b16 %v124
    %v398 = vunpack.c.h.b16 %v124
    %v399 = vunpack.c.l.b16 %v125
    %v400 = vunpack.c.h.b16 %v125
    %v401 = vunpack.c.l.b16 %v126
    %v402 = vunpack.c.h.b16 %v126
    %v403 = vunpack.c.l.b16 %v127
    %v404 = vunpack.c.h.b16 %v127
    %v405 = vunpack.c.l.b16 %v128
    %v406 = vunpack.c.h.b16 %v128
    %v407 = vunpack.c.l.b16 %v129
    %v408 = vunpack.c.h.b16 %v129
    %v409 = vunpack.c.l.b16 %v130
    %v410 = vunpack.c.h.b16 %v130
    %v411 = vunpack.c.l.b16 %v131
    %v412 = vunpack.c.h.b16 %v131
    %v413 = vunpack.c.l.b16 %v132
    %v414 = vunpack.c.h.b16 %v132
    %v415 = vunpack.c.l.b16 %v133
    %v416 = vunpack.c.h.b16 %v133
    %v417 = vunpack.c.l.b16 %v134
    %v418 = vunpack.c.h.b16 %v134
    %v419 = vunpack.c.l.b16 %v135
    %v420 = vunpack.c.h.b16 %v135
    %v421 = vunpack.c.l.b16 %v136
    %v422 = vunpack.c.h.b16 %v136
    %v423 = vunpack.c.l.b16 %v137
    %v424 = vunpack.c.h.b16 %v137
    %v425 = vunpack.c.l.b16 %v138
    %v426 = vunpack.c.h.b16 %v138
    %v427 = vunpack.c.l.b16 %v139
    %v428 = vunpack.c.h.b16 %v139
    %v429 = vunpack.c.l.b16 %v140
    %v430 = vunpack.c.h.b16 %v140
    %v431 = vunpack.c.l.b16 %v141
    %v432 = vunpack.c.h.b16 %v141
    %v433 = vunpack.c.l.b16 %v142
    %v434 = vunpack.c.h.b16 %v142
    %v435 = vunpack.c.l.b16 %v143
    %v436 = vunpack.c.h.b16 %v143
    %v437 = vunpack.c.l.b16 %v144
    %v438 = vunpack.c.h.b16 %v144
    %v439 = vunpack.c.l.b16 %v145
    %v440 = vunpack.c.h.b16 %v145
    %v441 = vunpack.c.l.b16 %v146
    %v442 = vunpack.c.h.b16 %v146
    %v443 = vunpack.c.l.b16 %v147
    %v444 = vunpack.c.h.b16 %v147
    %v445 = vunpack.c.l.b16 %v148
    %v446 = vunpack.c.h.b16 %v148
    %v447 = vunpack.c.l.b16 %v149
    %v448 = vunpack.c.h.b16 %v149
    %v449 = vunpack.c.l.b16 %v150
    %v450 = vunpack.c.h.b16 %v150
    %v451 = vunpack.c.l.b16 %v151
    %v452 = vunpack.c.h.b16 %v151
    %v453 = vunpack.c.l.b16 %v152
    %v454 = vunpack.c.h.b16 %v152
    %v455 = vunpack.c.l.b16 %v153
    %v456 = vunpack.c.h.b16 %v153
    %v457 = vunpack.c.l.b16 %v154
    %v458 = vunpack.c.h.b16 %v154
    %v459 = vunpack.c.l.b16 %v155
    %v460 = vunpack.c.h.b16 %v155
    %v461 = vunpack.c.l.b16 %v156
    %v462 = vunpack.c.h.b16 %v156
    %v463 = vpack.c.b16 %v269, %v267
    %v464 = vpack.c.b16 %v270, %v268
    %v465 = vpack.c.b16 %v273, %v271
    %v466 = vpack.c.b16 %v274, %v272
    %v467 = vpack.c.b16 %v277, %v275
    %v468 = vpack.c.b16 %v278, %v276
    %v469 = vpack.c.b16 %v281, %v279
    %v470 = vpack.c.b16 %v282, %v280
    %v471 = vpack.c.b16 %v285, %v283
    %v472 = vpack.c.b16 %v286, %v284
    %v473 = vpack.c.b16 %v289, %v287
    %v474 = vpack.c.b16 %v290, %v288
    %v475 = vpack.c.b16 %v293, %v291
    %v476 = vpack.c.b16 %v294, %v292
    %v477 = vpack.c.b16 %v297, %v295
    %v478 = vpack.c.b16 %v298, %v296
    %v479 = vpack.c.b16 %v301, %v299
    %v480 = vpack.c.b16 %v302, %v300
    %v481 = vpack.c.b16 %v305, %v303
    %v482 = vpack.c.b16 %v306, %v304
    %v483 = vpack.c.b16 %v309, %v307
    %v484 = vpack.c.b16 %v310, %v308
    %v485 = vpack.c.b16 %v313, %v311
    %v486 = vpack.c.b16 %v314, %v312
    %v487 = vpack.c.b16 %v317, %v315
    %v488 = vpack.c.b16 %v318, %v316
    %v489 = vpack.c.b16 %v321, %v319
    %v490 = vpack.c.b16 %v322, %v320
    %v491 = vpack.c.b16 %v325, %v323
    %v492 = vpack.c.b16 %v326, %v324
    %v493 = vpack.c.b16 %v329, %v327
    %v494 = vpack.c.b16 %v330, %v328
    %v495 = vpack.c.b16 %v333, %v331
    %v496 = vpack.c.b16 %v334, %v332
    %v497 = vpack.c.b16 %v337, %v335
    %v498 = vpack.c.b16 %v338, %v336
    %v499 = vpack.c.b16 %v341, %v339
    %v500 = vpack.c.b16 %v342, %v340
    %v501 = vpack.c.b16 %v345, %v343
    %v502 = vpack.c.b16 %v346, %v344
    %v503 = vpack.c.b16 %v349, %v347
    %v504 = vpack.c.b16 %v350, %v348
    %v505 = vpack.c.b16 %v353, %v351
    %v506 = vpack.c.b16 %v354, %v352
    %v507 = vpack.c.b16 %v357, %v355
    %v508 = vpack.c.b16 %v358, %v356
    %v509 = vpack.c.b16 %v361, %v359
    %v510 = vpack.c.b16 %v362, %v360
    %v511 = vpack.c.b16 %v365, %v363
    %v512 = vpack.c.b16 %v366, %v364
    %v513 = vpack.c.b16 %v369, %v367
    %v514 = vpack.c.b16 %v370, %v368
    %v515 = vpack.c.b16 %v373, %v371
    %v516 = vpack.c.b16 %v374, %v372
    %v517 = vpack.c.b16 %v377, %v375
    %v518 = vpack.c.b16 %v378, %v376
    %v519 = vpack.c.b16 %v381, %v379
    %v520 = vpack.c.b16 %v382, %v380
    %v521 = vpack.c.b16 %v385, %v383
    %v522 = vpack.c.b16 %v386, %v384
    %v523 = vpack.c.b16 %v389, %v387
    %v524 = vpack.c.b16 %v390, %v388
    %v525 = vpack.c.b16 %v393, %v391
    %v526 = vpack.c.b16 %v394, %v392
    %v527 = vpack.c.b16 %v397, %v395
    %v528 = vpack.c.b16 %v398, %v396
    %v529 = vpack.c.b16 %v401, %v399
    %v530 = vpack.c.b16 %v402, %v400
    %v531 = vpack.c.b16 %v405, %v403
    %v532 = vpack.c.b16 %v406, %v404
    %v533 = vpack.c.b16 %v409, %v407
    %v534 = vpack.c.b16 %v410, %v408
    %v535 = vpack.c.b16 %v413, %v411
    %v536 = vpack.c.b16 %v414, %v412
    %v537 = vpack.c.b16 %v417, %v415
    %v538 = vpack.c.b16 %v418, %v416
    %v539 = vpack.c.b16 %v421, %v419
    %v540 = vpack.c.b16 %v422, %v420
    %v541 = vpack.c.b16 %v425, %v423
    %v542 = vpack.c.b16 %v426, %v424
    %v543 = vpack.c.b16 %v429, %v427
    %v544 = vpack.c.b16 %v430, %v428
    %v545 = vpack.c.b16 %v433, %v431
    %v546 = vpack.c.b16 %v434, %v432
    %v547 = vpack.c.b16 %v437, %v435
    %v548 = vpack.c.b16 %v438, %v436
    %v549 = vpack.c.b16 %v441, %v439
    %v550 = vpack.c.b16 %v442, %v440
    %v551 = vpack.c.b16 %v445, %v443
    %v552 = vpack.c.b16 %v446, %v444
    %v553 = vpack.c.b16 %v449, %v447
    %v554 = vpack.c.b16 %v450, %v448
    %v555 = vpack.c.b16 %v453, %v451
    %v556 = vpack.c.b16 %v454, %v452
    %v557 = vpack.c.b16 %v457, %v455
    %v558 = vpack.c.b16 %v458, %v456
    %v559 = vpack.c.b16 %v461, %v459
    %v560 = vpack.c.b16 %v462, %v460
    %vm659 = vcmask 130048
    %v661 = vsel %vm659, %v58, 0
    %663 = vmatprep.subr.bf16.mxu0 %v464
    %664 = vmatpush1.bf16.msra.mxu0 %v463
    %665 = vmatprep.subr.bf16.mxu0 %v466
    %666 = vmatpush1.bf16.msra.mxu0 %v465
    %667 = vmatprep.subr.bf16.mxu0 %v468
    %668 = vmatpush1.bf16.msra.mxu0 %v467
    %669 = vmatprep.subr.bf16.mxu0 %v470
    %670 = vmatpush1.bf16.msra.mxu0 %v469
    %671 = vmatprep.subr.bf16.mxu0 %v472
    %672 = vmatpush1.bf16.msra.mxu0 %v471
    %673 = vmatprep.subr.bf16.mxu0 %v474
    %674 = vmatpush1.bf16.msra.mxu0 %v473
    %675 = vmatprep.subr.bf16.mxu0 %v476
    %676 = vmatpush1.bf16.msra.mxu0 %v475
    %677 = vmatprep.subr.bf16.mxu0 %v478
    %678 = vmatpush1.bf16.msra.mxu0 %v477
    %679 = vmatprep.subr.bf16.mxu0 %v480
    %680 = vmatpush1.bf16.msra.mxu0 %v479
    %681 = vmatprep.subr.bf16.mxu0 %v482
    %682 = vmatpush1.bf16.msra.mxu0 %v481
    %683 = vmatprep.subr.bf16.mxu0 %v484
    %684 = vmatpush1.bf16.msra.mxu0 %v483
    %685 = vmatprep.subr.bf16.mxu0 %v486
    %686 = vmatpush1.bf16.msra.mxu0 %v485
    %687 = vmatprep.subr.bf16.mxu0 %v488
    %688 = vmatpush1.bf16.msra.mxu0 %v487
    %689 = vmatprep.subr.bf16.mxu0 %v490
    %690 = vmatpush1.bf16.msra.mxu0 %v489
    %691 = vmatprep.subr.bf16.mxu0 %v492
    %692 = vmatpush1.bf16.msra.mxu0 %v491
    %693 = vmatprep.subr.bf16.mxu0 %v494
    %694 = vmatpush1.bf16.msra.mxu0 %v493
    %695 = vmatprep.mubr.bf16.mxu0 %v53
    %696 = vmatmul.mubr.bf16.gmra.mrb[0].mxu0 %v52
    %v697 = vpop.f32.mrb[0].mxu0
    %v698 = vadd.f32 %v162, %v697
    %v699 = vpop.f32.mrb[0].mxu0
    %v700 = vadd.f32 %v166, %v699
    %v701 = vpop.f32.mrb[0].mxu0
    %v702 = vpop.f32.mrb[0].mxu0
    %703 = vdwg.mxu0
    %704 = vmatprep.subr.bf16.mxu0 %v496
    %705 = vmatpush1.bf16.msra.mxu0 %v495
    %706 = vmatprep.subr.bf16.mxu0 %v498
    %707 = vmatpush1.bf16.msra.mxu0 %v497
    %708 = vmatprep.subr.bf16.mxu0 %v500
    %709 = vmatpush1.bf16.msra.mxu0 %v499
    %710 = vmatprep.subr.bf16.mxu0 %v502
    %711 = vmatpush1.bf16.msra.mxu0 %v501
    %712 = vmatprep.subr.bf16.mxu0 %v504
    %713 = vmatpush1.bf16.msra.mxu0 %v503
    %714 = vmatprep.subr.bf16.mxu0 %v506
    %715 = vmatpush1.bf16.msra.mxu0 %v505
    %716 = vmatprep.subr.bf16.mxu0 %v508
    %717 = vmatpush1.bf16.msra.mxu0 %v507
    %718 = vmatprep.subr.bf16.mxu0 %v510
    %719 = vmatpush1.bf16.msra.mxu0 %v509
    %720 = vmatprep.subr.bf16.mxu0 %v512
    %721 = vmatpush1.bf16.msra.mxu0 %v511
    %722 = vmatprep.subr.bf16.mxu0 %v514
    %723 = vmatpush1.bf16.msra.mxu0 %v513
    %724 = vmatprep.subr.bf16.mxu0 %v516
    %725 = vmatpush1.bf16.msra.mxu0 %v515
    %726 = vmatprep.subr.bf16.mxu0 %v518
    %727 = vmatpush1.bf16.msra.mxu0 %v517
    %728 = vmatprep.subr.bf16.mxu0 %v520
    %729 = vmatpush1.bf16.msra.mxu0 %v519
    %730 = vmatprep.subr.bf16.mxu0 %v522
    %731 = vmatpush1.bf16.msra.mxu0 %v521
    %732 = vmatprep.subr.bf16.mxu0 %v524
    %733 = vmatpush1.bf16.msra.mxu0 %v523
    %734 = vmatprep.subr.bf16.mxu0 %v526
    %735 = vmatpush1.bf16.msra.mxu0 %v525
    %736 = vmatprep.mubr.bf16.mxu0 %v55
    %737 = vmatmul.mubr.bf16.gmra.mrb[0].mxu0 %v54
    %v738 = vpop.f32.mrb[0].mxu0
    %v739 = vadd.f32 %v698, %v738
    %v740 = vpop.f32.mrb[0].mxu0
    %v741 = vadd.f32 %v700, %v740
    %v742 = vpop.f32.mrb[0].mxu0
    %v743 = vpop.f32.mrb[0].mxu0
    %744 = vdwg.mxu0
    %745 = vmatprep.subr.bf16.mxu0 %v528
    %746 = vmatpush1.bf16.msra.mxu0 %v527
    %747 = vmatprep.subr.bf16.mxu0 %v530
    %748 = vmatpush1.bf16.msra.mxu0 %v529
    %749 = vmatprep.subr.bf16.mxu0 %v532
    %750 = vmatpush1.bf16.msra.mxu0 %v531
    %751 = vmatprep.subr.bf16.mxu0 %v534
    %752 = vmatpush1.bf16.msra.mxu0 %v533
    %753 = vmatprep.subr.bf16.mxu0 %v536
    %754 = vmatpush1.bf16.msra.mxu0 %v535
    %755 = vmatprep.subr.bf16.mxu0 %v538
    %756 = vmatpush1.bf16.msra.mxu0 %v537
    %757 = vmatprep.subr.bf16.mxu0 %v540
    %758 = vmatpush1.bf16.msra.mxu0 %v539
    %759 = vmatprep.subr.bf16.mxu0 %v542
    %760 = vmatpush1.bf16.msra.mxu0 %v541
    %761 = vmatprep.subr.bf16.mxu0 %v544
    %762 = vmatpush1.bf16.msra.mxu0 %v543
    %763 = vmatprep.subr.bf16.mxu0 %v546
    %764 = vmatpush1.bf16.msra.mxu0 %v545
    %765 = vmatprep.subr.bf16.mxu0 %v548
    %766 = vmatpush1.bf16.msra.mxu0 %v547
    %767 = vmatprep.subr.bf16.mxu0 %v550
    %768 = vmatpush1.bf16.msra.mxu0 %v549
    %769 = vmatprep.subr.bf16.mxu0 %v552
    %770 = vmatpush1.bf16.msra.mxu0 %v551
    %771 = vmatprep.subr.bf16.mxu0 %v554
    %772 = vmatpush1.bf16.msra.mxu0 %v553
    %773 = vmatprep.subr.bf16.mxu0 %v556
    %774 = vmatpush1.bf16.msra.mxu0 %v555
    %775 = vmatprep.subr.bf16.mxu0 %v558
    %776 = vmatpush1.bf16.msra.mxu0 %v557
    %777 = vmatprep.mubr.bf16.mxu0 %v57
    %778 = vmatmul.mubr.bf16.gmra.mrb[0].mxu0 %v56
    %v779 = vpop.f32.mrb[0].mxu0
    %v780 = vadd.f32 %v739, %v779
    %v781 = vpop.f32.mrb[0].mxu0
    %v782 = vadd.f32 %v741, %v781
    %v783 = vpop.f32.mrb[0].mxu0
    %v784 = vpop.f32.mrb[0].mxu0
    %785 = vdwg.mxu0
    %786 = vmatprep.subr.bf16.mxu0 %v560
    %787 = vmatpush1.bf16.msra.mxu0 %v559
    %788 = vmatprep.subr.bf16.mxu0 0
    %789 = vmatpush1.bf16.msra.mxu0 0
    %790 = vmatprep.subr.bf16.mxu0 0
    %791 = vmatpush1.bf16.msra.mxu0 0
    %792 = vmatprep.subr.bf16.mxu0 0
    %793 = vmatpush1.bf16.msra.mxu0 0
    %794 = vmatprep.subr.bf16.mxu0 0
    %795 = vmatpush1.bf16.msra.mxu0 0
    %796 = vmatprep.subr.bf16.mxu0 0
    %797 = vmatpush1.bf16.msra.mxu0 0
    %798 = vmatprep.subr.bf16.mxu0 0
    %799 = vmatpush1.bf16.msra.mxu0 0
    %800 = vmatprep.subr.bf16.mxu0 0
    %801 = vmatpush1.bf16.msra.mxu0 0
    %802 = vmatprep.subr.bf16.mxu0 0
    %803 = vmatpush1.bf16.msra.mxu0 0
    %804 = vmatprep.subr.bf16.mxu0 0
    %805 = vmatpush1.bf16.msra.mxu0 0
    %806 = vmatprep.subr.bf16.mxu0 0
    %807 = vmatpush1.bf16.msra.mxu0 0
    %808 = vmatprep.subr.bf16.mxu0 0
    %809 = vmatpush1.bf16.msra.mxu0 0
    %810 = vmatprep.subr.bf16.mxu0 0
    %811 = vmatpush1.bf16.msra.mxu0 0
    %812 = vmatprep.subr.bf16.mxu0 0
    %813 = vmatpush1.bf16.msra.mxu0 0
    %814 = vmatprep.subr.bf16.mxu0 0
    %815 = vmatpush1.bf16.msra.mxu0 0
    %816 = vmatprep.subr.bf16.mxu0 0
    %817 = vmatpush1.bf16.msra.mxu0 0
    %818 = vmatprep.mubr.bf16.mxu0 0
    %819 = vmatmul.mubr.bf16.gmra.mrb[0].mxu0 %v661
    %v820 = vpop.f32.mrb[0].mxu0
    %v821 = vadd.f32 %v780, %v820
    %v822 = vpop.f32.mrb[0].mxu0
    %v823 = vadd.f32 %v782, %v822
    %v824 = vpop.f32.mrb[0].mxu0
    %v825 = vpop.f32.mrb[0].mxu0
    %826 = vdwg.mxu0
    %v827 = vmax.f32 %v821, 0.0
    %v828 = vmax.f32 %v823, 0.0
    %v829 = vpack.c.bf16 %v827, %v827
    %v830 = vpack.c.bf16 %v828, %v828
    %v831 = vld [vmem:[%s4] sm:$0xf]
    %v832 = vld [vmem:[%s4 + $0x4] sm:$0xf]
    %v833 = vld [vmem:[%s4 + $0x8] sm:$0xf]
    %v834 = vld [vmem:[%s4 + $0xc] sm:$0xf]
    %v835 = vld [vmem:[%s4 + $0x10] sm:$0xf]
    %v836 = vld [vmem:[%s4 + $0x14] sm:$0xf]
    %v837 = vld [vmem:[%s4 + $0x18] sm:$0xf]
    %v838 = vld [vmem:[%s4 + $0x1c] sm:$0xf]
    %v839 = vld [vmem:[%s4 + $0x20] sm:$0xf]
    %v840 = vld [vmem:[%s4 + $0x24] sm:$0xf]
    %v841 = vld [vmem:[%s4 + $0x28] sm:$0xf]
    %v842 = vld [vmem:[%s4 + $0x2c] sm:$0xf]
    %v843 = vld [vmem:[%s4 + $0x30] sm:$0xf]
    %v844 = vld [vmem:[%s4 + $0x34] sm:$0xf]
    %v845 = vld [vmem:[%s4 + $0x38] sm:$0xf]
    %v846 = vld [vmem:[%s4 + $0x3c] sm:$0xf]
    %v847 = vld [vmem:[%s4 + $0x40] sm:$0xf]
    %v848 = vld [vmem:[%s4 + $0x44] sm:$0xf]
    %v849 = vld [vmem:[%s4 + $0x48] sm:$0xf]
    %v850 = vld [vmem:[%s4 + $0x4c] sm:$0xf]
    %v851 = vld [vmem:[%s4 + $0x50] sm:$0xf]
    %v852 = vld [vmem:[%s4 + $0x54] sm:$0xf]
    %v853 = vld [vmem:[%s4 + $0x58] sm:$0xf]
    %v854 = vld [vmem:[%s4 + $0x5c] sm:$0xf]
    %v855 = vld [vmem:[%s4 + $0x60] sm:$0xf]
    %v856 = vld [vmem:[%s4 + $0x64] sm:$0xf]
    %v857 = vld [vmem:[%s4 + $0x68] sm:$0xf]
    %v858 = vld [vmem:[%s4 + $0x6c] sm:$0xf]
    %v859 = vld [vmem:[%s4 + $0x70] sm:$0xf]
    %v860 = vld [vmem:[%s4 + $0x74] sm:$0xf]
    %v861 = vld [vmem:[%s4 + $0x78] sm:$0xf]
    %v862 = vld [vmem:[%s4 + $0x7c] sm:$0xf]
    %v863 = vld [vmem:[%s5] sm:$0x1]
    %v865 = vlaneseq
    %v866 = vshrl.u32 %v865, 7
    %v867 = vsub.s32 0, %v866
    %v868 = vrot.slane %v863, %v867
    %v902 = vunpack.c.l.b16 %v831
    %v903 = vunpack.c.l.b16 %v832
    %v904 = vunpack.c.l.b16 %v833
    %v905 = vunpack.c.l.b16 %v834
    %v906 = vunpack.c.l.b16 %v835
    %v907 = vunpack.c.l.b16 %v836
    %v908 = vunpack.c.l.b16 %v837
    %v909 = vunpack.c.l.b16 %v838
    %v910 = vunpack.c.l.b16 %v839
    %v911 = vunpack.c.l.b16 %v840
    %v912 = vunpack.c.l.b16 %v841
    %v913 = vunpack.c.l.b16 %v842
    %v914 = vunpack.c.l.b16 %v843
    %v915 = vunpack.c.l.b16 %v844
    %v916 = vunpack.c.l.b16 %v845
    %v917 = vunpack.c.l.b16 %v846
    %v918 = vunpack.c.l.b16 %v847
    %v919 = vunpack.c.l.b16 %v848
    %v920 = vunpack.c.l.b16 %v849
    %v921 = vunpack.c.l.b16 %v850
    %v922 = vunpack.c.l.b16 %v851
    %v923 = vunpack.c.l.b16 %v852
    %v924 = vunpack.c.l.b16 %v853
    %v925 = vunpack.c.l.b16 %v854
    %v926 = vunpack.c.l.b16 %v855
    %v927 = vunpack.c.l.b16 %v856
    %v928 = vunpack.c.l.b16 %v857
    %v929 = vunpack.c.l.b16 %v858
    %v930 = vunpack.c.l.b16 %v859
    %v931 = vunpack.c.l.b16 %v860
    %v932 = vunpack.c.l.b16 %v861
    %v933 = vunpack.c.l.b16 %v862
    %v934 = vpack.c.b16 %v903, %v902
    %v935 = vpack.c.b16 %v905, %v904
    %v936 = vpack.c.b16 %v907, %v906
    %v937 = vpack.c.b16 %v909, %v908
    %v938 = vpack.c.b16 %v911, %v910
    %v939 = vpack.c.b16 %v913, %v912
    %v940 = vpack.c.b16 %v915, %v914
    %v941 = vpack.c.b16 %v917, %v916
    %v942 = vpack.c.b16 %v919, %v918
    %v943 = vpack.c.b16 %v921, %v920
    %v944 = vpack.c.b16 %v923, %v922
    %v945 = vpack.c.b16 %v925, %v924
    %v946 = vpack.c.b16 %v927, %v926
    %v947 = vpack.c.b16 %v929, %v928
    %v948 = vpack.c.b16 %v931, %v930
    %v949 = vpack.c.b16 %v933, %v932
    %966 = vmatprep.subr.bf16.mxu0 0
    %967 = vmatpush1.bf16.msra.mxu0 %v934
    %968 = vmatprep.subr.bf16.mxu0 0
    %969 = vmatpush1.bf16.msra.mxu0 %v935
    %970 = vmatprep.subr.bf16.mxu0 0
    %971 = vmatpush1.bf16.msra.mxu0 %v936
    %972 = vmatprep.subr.bf16.mxu0 0
    %973 = vmatpush1.bf16.msra.mxu0 %v937
    %974 = vmatprep.subr.bf16.mxu0 0
    %975 = vmatpush1.bf16.msra.mxu0 %v938
    %976 = vmatprep.subr.bf16.mxu0 0
    %977 = vmatpush1.bf16.msra.mxu0 %v939
    %978 = vmatprep.subr.bf16.mxu0 0
    %979 = vmatpush1.bf16.msra.mxu0 %v940
    %980 = vmatprep.subr.bf16.mxu0 0
    %981 = vmatpush1.bf16.msra.mxu0 %v941
    %982 = vmatprep.subr.bf16.mxu0 0
    %983 = vmatpush1.bf16.msra.mxu0 %v942
    %984 = vmatprep.subr.bf16.mxu0 0
    %985 = vmatpush1.bf16.msra.mxu0 %v943
    %986 = vmatprep.subr.bf16.mxu0 0
    %987 = vmatpush1.bf16.msra.mxu0 %v944
    %988 = vmatprep.subr.bf16.mxu0 0
    %989 = vmatpush1.bf16.msra.mxu0 %v945
    %990 = vmatprep.subr.bf16.mxu0 0
    %991 = vmatpush1.bf16.msra.mxu0 %v946
    %992 = vmatprep.subr.bf16.mxu0 0
    %993 = vmatpush1.bf16.msra.mxu0 %v947
    %994 = vmatprep.subr.bf16.mxu0 0
    %995 = vmatpush1.bf16.msra.mxu0 %v948
    %996 = vmatprep.subr.bf16.mxu0 0
    %997 = vmatpush1.bf16.msra.mxu0 %v949
    %998 = vmatprep.mubr.bf16.mxu0 %v830
    %999 = vmatmul.mubr.bf16.gmra.mrb[0].mxu0 %v829
    %v1000 = vpop.f32.mrb[0].mxu0
    %v1001 = vadd.f32 %v868, %v1000
    %v1002 = vpop.f32.mrb[0].mxu0
    %v1003 = vpop.f32.mrb[0].mxu0
    %v1004 = vpop.f32.mrb[0].mxu0
    %1005 = vdwg.mxu0
    %v1006 = vpack.c.bf16 %v1001, %v1001
    %v1007 = vld [vmem:[%s6] sm:$0xff]
    %v1008 = vld [vmem:[%s6 + $0x8] sm:$0xff]
    %v1009 = vld [vmem:[%s6 + $0x10] sm:$0xff]
    %v1010 = vld [vmem:[%s6 + $0x18] sm:$0xff]
    %v1011 = vld [vmem:[%s6 + $0x20] sm:$0xff]
    %v1012 = vld [vmem:[%s6 + $0x28] sm:$0xff]
    %v1013 = vld [vmem:[%s6 + $0x30] sm:$0xff]
    %v1014 = vld [vmem:[%s6 + $0x38] sm:$0xff]
    %v1015 = vld [vmem:[%s6 + $0x40] sm:$0xff]
    %v1016 = vld [vmem:[%s6 + $0x48] sm:$0xff]
    %v1017 = vld [vmem:[%s6 + $0x50] sm:$0xff]
    %v1018 = vld [vmem:[%s6 + $0x58] sm:$0xff]
    %v1019 = vld [vmem:[%s6 + $0x60] sm:$0xff]
    %v1020 = vld [vmem:[%s6 + $0x68] sm:$0xff]
    %v1021 = vld [vmem:[%s6 + $0x70] sm:$0xff]
    %v1022 = vld [vmem:[%s6 + $0x78] sm:$0xff]
    %v1023 = vld [vmem:[%s7] sm:$0x3]
    %v1025 = vlaneseq
    %v1026 = vshrl.u32 %v1025, 7
    %v1027 = vsub.s32 0, %v1026
    %v1028 = vrot.slane %v1023, %v1027
    %v1029 = vlaneseq
    %v1030 = vshrl.u32 %v1029, 7
    %v1031 = vsub.s32 1, %v1030
    %v1032 = vrot.slane %v1023, %v1031
    %v1051 = vunpack.c.l.b16 %v1007
    %v1052 = vunpack.c.h.b16 %v1007
    %v1053 = vunpack.c.l.b16 %v1008
    %v1054 = vunpack.c.h.b16 %v1008
    %v1055 = vunpack.c.l.b16 %v1009
    %v1056 = vunpack.c.h.b16 %v1009
    %v1057 = vunpack.c.l.b16 %v1010
    %v1058 = vunpack.c.h.b16 %v1010
    %v1059 = vunpack.c.l.b16 %v1011
    %v1060 = vunpack.c.h.b16 %v1011
    %v1061 = vunpack.c.l.b16 %v1012
    %v1062 = vunpack.c.h.b16 %v1012
    %v1063 = vunpack.c.l.b16 %v1013
    %v1064 = vunpack.c.h.b16 %v1013
    %v1065 = vunpack.c.l.b16 %v1014
    %v1066 = vunpack.c.h.b16 %v1014
    %v1067 = vunpack.c.l.b16 %v1015
    %v1068 = vunpack.c.h.b16 %v1015
    %v1069 = vunpack.c.l.b16 %v1016
    %v1070 = vunpack.c.h.b16 %v1016
    %v1071 = vunpack.c.l.b16 %v1017
    %v1072 = vunpack.c.h.b16 %v1017
    %v1073 = vunpack.c.l.b16 %v1018
    %v1074 = vunpack.c.h.b16 %v1018
    %v1075 = vunpack.c.l.b16 %v1019
    %v1076 = vunpack.c.h.b16 %v1019
    %v1077 = vunpack.c.l.b16 %v1020
    %v1078 = vunpack.c.h.b16 %v1020
    %v1079 = vunpack.c.l.b16 %v1021
    %v1080 = vunpack.c.h.b16 %v1021
    %v1081 = vunpack.c.l.b16 %v1022
    %v1082 = vunpack.c.h.b16 %v1022
    %v1083 = vpack.c.b16 %v1053, %v1051
    %v1084 = vpack.c.b16 %v1054, %v1052
    %v1085 = vpack.c.b16 %v1057, %v1055
    %v1086 = vpack.c.b16 %v1058, %v1056
    %v1087 = vpack.c.b16 %v1061, %v1059
    %v1088 = vpack.c.b16 %v1062, %v1060
    %v1089 = vpack.c.b16 %v1065, %v1063
    %v1090 = vpack.c.b16 %v1066, %v1064
    %v1091 = vpack.c.b16 %v1069, %v1067
    %v1092 = vpack.c.b16 %v1070, %v1068
    %v1093 = vpack.c.b16 %v1073, %v1071
    %v1094 = vpack.c.b16 %v1074, %v1072
    %v1095 = vpack.c.b16 %v1077, %v1075
    %v1096 = vpack.c.b16 %v1078, %v1076
    %v1097 = vpack.c.b16 %v1081, %v1079
    %v1098 = vpack.c.b16 %v1082, %v1080
    %1115 = vmatprep.subr.bf16.mxu0 %v1084
    %1116 = vmatpush1.bf16.msra.mxu0 %v1083
    %1117 = vmatprep.subr.bf16.mxu0 %v1086
    %1118 = vmatpush1.bf16.msra.mxu0 %v1085
    %1119 = vmatprep.subr.bf16.mxu0 %v1088
    %1120 = vmatpush1.bf16.msra.mxu0 %v1087
    %1121 = vmatprep.subr.bf16.mxu0 %v1090
    %1122 = vmatpush1.bf16.msra.mxu0 %v1089
    %1123 = vmatprep.subr.bf16.mxu0 %v1092
    %1124 = vmatpush1.bf16.msra.mxu0 %v1091
    %1125 = vmatprep.subr.bf16.mxu0 %v1094
    %1126 = vmatpush1.bf16.msra.mxu0 %v1093
    %1127 = vmatprep.subr.bf16.mxu0 %v1096
    %1128 = vmatpush1.bf16.msra.mxu0 %v1095
    %1129 = vmatprep.subr.bf16.mxu0 %v1098
    %1130 = vmatpush1.bf16.msra.mxu0 %v1097
    %1131 = vmatprep.subr.bf16.mxu0 0
    %1132 = vmatpush1.bf16.msra.mxu0 0
    %1133 = vmatprep.subr.bf16.mxu0 0
    %1134 = vmatpush1.bf16.msra.mxu0 0
    %1135 = vmatprep.subr.bf16.mxu0 0
    %1136 = vmatpush1.bf16.msra.mxu0 0
    %1137 = vmatprep.subr.bf16.mxu0 0
    %1138 = vmatpush1.bf16.msra.mxu0 0
    %1139 = vmatprep.subr.bf16.mxu0 0
    %1140 = vmatpush1.bf16.msra.mxu0 0
    %1141 = vmatprep.subr.bf16.mxu0 0
    %1142 = vmatpush1.bf16.msra.mxu0 0
    %1143 = vmatprep.subr.bf16.mxu0 0
    %1144 = vmatpush1.bf16.msra.mxu0 0
    %1145 = vmatprep.subr.bf16.mxu0 0
    %1146 = vmatpush1.bf16.msra.mxu0 0
    %1147 = vmatprep.mubr.bf16.mxu0 0
    %1148 = vmatmul.mubr.bf16.gmra.mrb[0].mxu0 %v1006
    %v1149 = vpop.f32.mrb[0].mxu0
    %v1150 = vadd.f32 %v1028, %v1149
    %v1151 = vpop.f32.mrb[0].mxu0
    %v1152 = vadd.f32 %v1032, %v1151
    %v1153 = vpop.f32.mrb[0].mxu0
    %v1154 = vpop.f32.mrb[0].mxu0
    %1155 = vdwg.mxu0
    %v1156 = vld [vmem:[%s1] sm:$0xff]
    %v1157 = vmul.f32 %v1152, 0.5
    %v1158 = vmul.f32 %v1157, 1.442695
    %v1159 = vpow.pop %v1158
    %v1160 = vmul.f32 %v1156, %v1159
    %v1161 = vadd.f32 %v1150, %v1160
    %v1162 = vpack.c.bf16 %v1161, %v1161
    %v1163 = vld [vmem:[%s8] sm:$0xff]
    %v1164 = vld [vmem:[%s8 + $0x8] sm:$0xff]
    %v1165 = vld [vmem:[%s8 + $0x10] sm:$0xff]
    %v1166 = vld [vmem:[%s8 + $0x18] sm:$0xff]
    %v1167 = vld [vmem:[%s8 + $0x20] sm:$0xff]
    %v1168 = vld [vmem:[%s8 + $0x28] sm:$0xff]
    %v1169 = vld [vmem:[%s8 + $0x30] sm:$0xff]
    %v1170 = vld [vmem:[%s8 + $0x38] sm:$0xff]
    %v1171 = vld [vmem:[%s8 + $0x40] sm:$0xff]
    %v1172 = vld [vmem:[%s8 + $0x48] sm:$0xff]
    %v1173 = vld [vmem:[%s8 + $0x50] sm:$0xff]
    %v1174 = vld [vmem:[%s8 + $0x58] sm:$0xff]
    %v1175 = vld [vmem:[%s8 + $0x60] sm:$0xff]
    %v1176 = vld [vmem:[%s8 + $0x68] sm:$0xff]
    %v1177 = vld [vmem:[%s8 + $0x70] sm:$0xff]
    %v1178 = vld [vmem:[%s8 + $0x78] sm:$0xff]
    %v1179 = vld [vmem:[%s9] sm:$0x3]
    %v1181 = vlaneseq
    %v1182 = vshrl.u32 %v1181, 7
    %v1183 = vsub.s32 0, %v1182
    %v1184 = vrot.slane %v1179, %v1183
    %v1185 = vlaneseq
    %v1186 = vshrl.u32 %v1185, 7
    %v1187 = vsub.s32 1, %v1186
    %v1188 = vrot.slane %v1179, %v1187
    %v1207 = vunpack.c.l.b16 %v1163
    %v1208 = vunpack.c.h.b16 %v1163
    %v1209 = vunpack.c.l.b16 %v1164
    %v1210 = vunpack.c.h.b16 %v1164
    %v1211 = vunpack.c.l.b16 %v1165
    %v1212 = vunpack.c.h.b16 %v1165
    %v1213 = vunpack.c.l.b16 %v1166
    %v1214 = vunpack.c.h.b16 %v1166
    %v1215 = vunpack.c.l.b16 %v1167
    %v1216 = vunpack.c.h.b16 %v1167
    %v1217 = vunpack.c.l.b16 %v1168
    %v1218 = vunpack.c.h.b16 %v1168
    %v1219 = vunpack.c.l.b16 %v1169
    %v1220 = vunpack.c.h.b16 %v1169
    %v1221 = vunpack.c.l.b16 %v1170
    %v1222 = vunpack.c.h.b16 %v1170
    %v1223 = vunpack.c.l.b16 %v1171
    %v1224 = vunpack.c.h.b16 %v1171
    %v1225 = vunpack.c.l.b16 %v1172
    %v1226 = vunpack.c.h.b16 %v1172
    %v1227 = vunpack.c.l.b16 %v1173
    %v1228 = vunpack.c.h.b16 %v1173
    %v1229 = vunpack.c.l.b16 %v1174
    %v1230 = vunpack.c.h.b16 %v1174
    %v1231 = vunpack.c.l.b16 %v1175
    %v1232 = vunpack.c.h.b16 %v1175
    %v1233 = vunpack.c.l.b16 %v1176
    %v1234 = vunpack.c.h.b16 %v1176
    %v1235 = vunpack.c.l.b16 %v1177
    %v1236 = vunpack.c.h.b16 %v1177
    %v1237 = vunpack.c.l.b16 %v1178
    %v1238 = vunpack.c.h.b16 %v1178
    %v1239 = vpack.c.b16 %v1209, %v1207
    %v1240 = vpack.c.b16 %v1210, %v1208
    %v1241 = vpack.c.b16 %v1213, %v1211
    %v1242 = vpack.c.b16 %v1214, %v1212
    %v1243 = vpack.c.b16 %v1217, %v1215
    %v1244 = vpack.c.b16 %v1218, %v1216
    %v1245 = vpack.c.b16 %v1221, %v1219
    %v1246 = vpack.c.b16 %v1222, %v1220
    %v1247 = vpack.c.b16 %v1225, %v1223
    %v1248 = vpack.c.b16 %v1226, %v1224
    %v1249 = vpack.c.b16 %v1229, %v1227
    %v1250 = vpack.c.b16 %v1230, %v1228
    %v1251 = vpack.c.b16 %v1233, %v1231
    %v1252 = vpack.c.b16 %v1234, %v1232
    %v1253 = vpack.c.b16 %v1237, %v1235
    %v1254 = vpack.c.b16 %v1238, %v1236
    %1271 = vmatprep.subr.bf16.mxu0 %v1240
    %1272 = vmatpush1.bf16.msra.mxu0 %v1239
    %1273 = vmatprep.subr.bf16.mxu0 %v1242
    %1274 = vmatpush1.bf16.msra.mxu0 %v1241
    %1275 = vmatprep.subr.bf16.mxu0 %v1244
    %1276 = vmatpush1.bf16.msra.mxu0 %v1243
    %1277 = vmatprep.subr.bf16.mxu0 %v1246
    %1278 = vmatpush1.bf16.msra.mxu0 %v1245
    %1279 = vmatprep.subr.bf16.mxu0 %v1248
    %1280 = vmatpush1.bf16.msra.mxu0 %v1247
    %1281 = vmatprep.subr.bf16.mxu0 %v1250
    %1282 = vmatpush1.bf16.msra.mxu0 %v1249
    %1283 = vmatprep.subr.bf16.mxu0 %v1252
    %1284 = vmatpush1.bf16.msra.mxu0 %v1251
    %1285 = vmatprep.subr.bf16.mxu0 %v1254
    %1286 = vmatpush1.bf16.msra.mxu0 %v1253
    %1287 = vmatprep.subr.bf16.mxu0 0
    %1288 = vmatpush1.bf16.msra.mxu0 0
    %1289 = vmatprep.subr.bf16.mxu0 0
    %1290 = vmatpush1.bf16.msra.mxu0 0
    %1291 = vmatprep.subr.bf16.mxu0 0
    %1292 = vmatpush1.bf16.msra.mxu0 0
    %1293 = vmatprep.subr.bf16.mxu0 0
    %1294 = vmatpush1.bf16.msra.mxu0 0
    %1295 = vmatprep.subr.bf16.mxu0 0
    %1296 = vmatpush1.bf16.msra.mxu0 0
    %1297 = vmatprep.subr.bf16.mxu0 0
    %1298 = vmatpush1.bf16.msra.mxu0 0
    %1299 = vmatprep.subr.bf16.mxu0 0
    %1300 = vmatpush1.bf16.msra.mxu0 0
    %1301 = vmatprep.subr.bf16.mxu0 0
    %1302 = vmatpush1.bf16.msra.mxu0 0
    %1303 = vmatprep.mubr.bf16.mxu0 0
    %1304 = vmatmul.mubr.bf16.gmra.mrb[0].mxu0 %v1162
    %v1305 = vpop.f32.mrb[0].mxu0
    %v1306 = vadd.f32 %v1184, %v1305
    %v1307 = vpop.f32.mrb[0].mxu0
    %v1308 = vadd.f32 %v1188, %v1307
    %v1309 = vpop.f32.mrb[0].mxu0
    %v1310 = vpop.f32.mrb[0].mxu0
    %1311 = vdwg.mxu0
    %v1312 = vmax.f32 %v1306, 0.0
    %v1313 = vmax.f32 %v1308, 0.0
    %v1314 = vpack.c.bf16 %v1312, %v1312
    %v1315 = vpack.c.bf16 %v1313, %v1313
    %v1316 = vld [vmem:[%s10] sm:$0xff]
    %v1317 = vld [vmem:[%s10 + $0x8] sm:$0xff]
    %v1318 = vld [vmem:[%s10 + $0x10] sm:$0xff]
    %v1319 = vld [vmem:[%s10 + $0x18] sm:$0xf]
    %v1320 = vld [vmem:[%s10 + $0x1c] sm:$0xff]
    %v1321 = vld [vmem:[%s10 + $0x24] sm:$0xff]
    %v1322 = vld [vmem:[%s10 + $0x2c] sm:$0xff]
    %v1323 = vld [vmem:[%s10 + $0x34] sm:$0xf]
    %v1324 = vld [vmem:[%s10 + $0x38] sm:$0xff]
    %v1325 = vld [vmem:[%s10 + $0x40] sm:$0xff]
    %v1326 = vld [vmem:[%s10 + $0x48] sm:$0xff]
    %v1327 = vld [vmem:[%s10 + $0x50] sm:$0xf]
    %v1328 = vld [vmem:[%s10 + $0x54] sm:$0xff]
    %v1329 = vld [vmem:[%s10 + $0x5c] sm:$0xff]
    %v1330 = vld [vmem:[%s10 + $0x64] sm:$0xff]
    %v1331 = vld [vmem:[%s10 + $0x6c] sm:$0xf]
    %v1332 = vld [vmem:[%s10 + $0x70] sm:$0xff]
    %v1333 = vld [vmem:[%s10 + $0x78] sm:$0xff]
    %v1334 = vld [vmem:[%s10 + $0x80] sm:$0xff]
    %v1335 = vld [vmem:[%s10 + $0x88] sm:$0xf]
    %v1336 = vld [vmem:[%s10 + $0x8c] sm:$0xff]
    %v1337 = vld [vmem:[%s10 + $0x94] sm:$0xff]
    %v1338 = vld [vmem:[%s10 + $0x9c] sm:$0xff]
    %v1339 = vld [vmem:[%s10 + $0xa4] sm:$0xf]
    %v1340 = vld [vmem:[%s10 + $0xa8] sm:$0xff]
    %v1341 = vld [vmem:[%s10 + $0xb0] sm:$0xff]
    %v1342 = vld [vmem:[%s10 + $0xb8] sm:$0xff]
    %v1343 = vld [vmem:[%s10 + $0xc0] sm:$0xf]
    %v1344 = vld [vmem:[%s10 + $0xc4] sm:$0xff]
    %v1345 = vld [vmem:[%s10 + $0xcc] sm:$0xff]
    %v1346 = vld [vmem:[%s10 + $0xd4] sm:$0xff]
    %v1347 = vld [vmem:[%s10 + $0xdc] sm:$0xf]
    %v1348 = vld [vmem:[%s10 + $0xe0] sm:$0xff]
    %v1349 = vld [vmem:[%s10 + $0xe8] sm:$0xff]
    %v1350 = vld [vmem:[%s10 + $0xf0] sm:$0xff]
    %v1351 = vld [vmem:[%s10 + $0xf8] sm:$0xf]
    %v1352 = vld [vmem:[%s10 + $0xfc] sm:$0xff]
    %v1353 = vld [vmem:[%s10 + $0x104] sm:$0xff]
    %v1354 = vld [vmem:[%s10 + $0x10c] sm:$0xff]
    %v1355 = vld [vmem:[%s10 + $0x114] sm:$0xf]
    %v1356 = vld [vmem:[%s10 + $0x118] sm:$0xff]
    %v1357 = vld [vmem:[%s10 + $0x120] sm:$0xff]
    %v1358 = vld [vmem:[%s10 + $0x128] sm:$0xff]
    %v1359 = vld [vmem:[%s10 + $0x130] sm:$0xf]
    %v1360 = vld [vmem:[%s10 + $0x134] sm:$0xff]
    %v1361 = vld [vmem:[%s10 + $0x13c] sm:$0xff]
    %v1362 = vld [vmem:[%s10 + $0x144] sm:$0xff]
    %v1363 = vld [vmem:[%s10 + $0x14c] sm:$0xf]
    %v1364 = vld [vmem:[%s10 + $0x150] sm:$0xff]
    %v1365 = vld [vmem:[%s10 + $0x158] sm:$0xff]
    %v1366 = vld [vmem:[%s10 + $0x160] sm:$0xff]
    %v1367 = vld [vmem:[%s10 + $0x168] sm:$0xf]
    %v1368 = vld [vmem:[%s10 + $0x16c] sm:$0xff]
    %v1369 = vld [vmem:[%s10 + $0x174] sm:$0xff]
    %v1370 = vld [vmem:[%s10 + $0x17c] sm:$0xff]
    %v1371 = vld [vmem:[%s10 + $0x184] sm:$0xf]
    %v1372 = vld [vmem:[%s10 + $0x188] sm:$0xff]
    %v1373 = vld [vmem:[%s10 + $0x190] sm:$0xff]
    %v1374 = vld [vmem:[%s10 + $0x198] sm:$0xff]
    %v1375 = vld [vmem:[%s10 + $0x1a0] sm:$0xf]
    %v1376 = vld [vmem:[%s10 + $0x1a4] sm:$0xff]
    %v1377 = vld [vmem:[%s10 + $0x1ac] sm:$0xff]
    %v1378 = vld [vmem:[%s10 + $0x1b4] sm:$0xff]
    %v1379 = vld [vmem:[%s10 + $0x1bc] sm:$0xf]
    %v1380 = vld [vmem:[%s10 + $0x1c0] sm:$0xff]
    %v1381 = vld [vmem:[%s10 + $0x1c8] sm:$0xff]
    %v1382 = vld [vmem:[%s10 + $0x1d0] sm:$0xff]
    %v1383 = vld [vmem:[%s10 + $0x1d8] sm:$0xf]
    %v1384 = vld [vmem:[%s10 + $0x1dc] sm:$0xff]
    %v1385 = vld [vmem:[%s10 + $0x1e4] sm:$0xff]
    %v1386 = vld [vmem:[%s10 + $0x1ec] sm:$0xff]
    %v1387 = vld [vmem:[%s10 + $0x1f4] sm:$0xf]
    %v1388 = vld [vmem:[%s10 + $0x1f8] sm:$0xff]
    %v1389 = vld [vmem:[%s10 + $0x200] sm:$0xff]
    %v1390 = vld [vmem:[%s10 + $0x208] sm:$0xff]
    %v1391 = vld [vmem:[%s10 + $0x210] sm:$0xf]
    %v1392 = vld [vmem:[%s10 + $0x214] sm:$0xff]
    %v1393 = vld [vmem:[%s10 + $0x21c] sm:$0xff]
    %v1394 = vld [vmem:[%s10 + $0x224] sm:$0xff]
    %v1395 = vld [vmem:[%s10 + $0x22c] sm:$0xf]
    %v1396 = vld [vmem:[%s10 + $0x230] sm:$0xff]
    %v1397 = vld [vmem:[%s10 + $0x238] sm:$0xff]
    %v1398 = vld [vmem:[%s10 + $0x240] sm:$0xff]
    %v1399 = vld [vmem:[%s10 + $0x248] sm:$0xf]
    %v1400 = vld [vmem:[%s10 + $0x24c] sm:$0xff]
    %v1401 = vld [vmem:[%s10 + $0x254] sm:$0xff]
    %v1402 = vld [vmem:[%s10 + $0x25c] sm:$0xff]
    %v1403 = vld [vmem:[%s10 + $0x264] sm:$0xf]
    %v1404 = vld [vmem:[%s10 + $0x268] sm:$0xff]
    %v1405 = vld [vmem:[%s10 + $0x270] sm:$0xff]
    %v1406 = vld [vmem:[%s10 + $0x278] sm:$0xff]
    %v1407 = vld [vmem:[%s10 + $0x280] sm:$0xf]
    %v1408 = vld [vmem:[%s10 + $0x284] sm:$0xff]
    %v1409 = vld [vmem:[%s10 + $0x28c] sm:$0xff]
    %v1410 = vld [vmem:[%s10 + $0x294] sm:$0xff]
    %v1411 = vld [vmem:[%s10 + $0x29c] sm:$0xf]
    %v1412 = vld [vmem:[%s10 + $0x2a0] sm:$0xff]
    %v1413 = vld [vmem:[%s10 + $0x2a8] sm:$0xff]
    %v1414 = vld [vmem:[%s10 + $0x2b0] sm:$0xff]
    %v1415 = vld [vmem:[%s10 + $0x2b8] sm:$0xf]
    %v1416 = vld [vmem:[%s10 + $0x2bc] sm:$0xff]
    %v1417 = vld [vmem:[%s10 + $0x2c4] sm:$0xff]
    %v1418 = vld [vmem:[%s10 + $0x2cc] sm:$0xff]
    %v1419 = vld [vmem:[%s10 + $0x2d4] sm:$0xf]
    %v1420 = vld [vmem:[%s10 + $0x2d8] sm:$0xff]
    %v1421 = vld [vmem:[%s10 + $0x2e0] sm:$0xff]
    %v1422 = vld [vmem:[%s10 + $0x2e8] sm:$0xff]
    %v1423 = vld [vmem:[%s10 + $0x2f0] sm:$0xf]
    %v1424 = vld [vmem:[%s10 + $0x2f4] sm:$0xff]
    %v1425 = vld [vmem:[%s10 + $0x2fc] sm:$0xff]
    %v1426 = vld [vmem:[%s10 + $0x304] sm:$0xff]
    %v1427 = vld [vmem:[%s10 + $0x30c] sm:$0xf]
    %v1428 = vld [vmem:[%s10 + $0x310] sm:$0xff]
    %v1429 = vld [vmem:[%s10 + $0x318] sm:$0xff]
    %v1430 = vld [vmem:[%s10 + $0x320] sm:$0xff]
    %v1431 = vld [vmem:[%s10 + $0x328] sm:$0xf]
    %v1432 = vld [vmem:[%s10 + $0x32c] sm:$0xff]
    %v1433 = vld [vmem:[%s10 + $0x334] sm:$0xff]
    %v1434 = vld [vmem:[%s10 + $0x33c] sm:$0xff]
    %v1435 = vld [vmem:[%s10 + $0x344] sm:$0xf]
    %v1436 = vld [vmem:[%s10 + $0x348] sm:$0xff]
    %v1437 = vld [vmem:[%s10 + $0x350] sm:$0xff]
    %v1438 = vld [vmem:[%s10 + $0x358] sm:$0xff]
    %v1439 = vld [vmem:[%s10 + $0x360] sm:$0xf]
    %v1440 = vld [vmem:[%s10 + $0x364] sm:$0xff]
    %v1441 = vld [vmem:[%s10 + $0x36c] sm:$0xff]
    %v1442 = vld [vmem:[%s10 + $0x374] sm:$0xff]
    %v1443 = vld [vmem:[%s10 + $0x37c] sm:$0xf]
    %v1444 = vld [vmem:[%s11] sm:$0x7f]
    %v1446 = vlaneseq
    %v1447 = vshrl.u32 %v1446, 7
    %v1448 = vsub.s32 0, %v1447
    %v1449 = vrot.slane %v1444, %v1448
    %v1450 = vlaneseq
    %v1451 = vshrl.u32 %v1450, 7
    %v1452 = vsub.s32 1, %v1451
    %v1453 = vrot.slane %v1444, %v1452
    %v1454 = vlaneseq
    %v1455 = vshrl.u32 %v1454, 7
    %v1456 = vsub.s32 2, %v1455
    %v1457 = vrot.slane %v1444, %v1456
    %v1458 = vlaneseq
    %v1459 = vshrl.u32 %v1458, 7
    %v1460 = vsub.s32 3, %v1459
    %v1461 = vrot.slane %v1444, %v1460
    %v1462 = vlaneseq
    %v1463 = vshrl.u32 %v1462, 7
    %v1464 = vsub.s32 4, %v1463
    %v1465 = vrot.slane %v1444, %v1464
    %v1466 = vlaneseq
    %v1467 = vshrl.u32 %v1466, 7
    %v1468 = vsub.s32 5, %v1467
    %v1469 = vrot.slane %v1444, %v1468
    %v1470 = vlaneseq
    %v1471 = vshrl.u32 %v1470, 7
    %v1472 = vsub.s32 6, %v1471
    %v1473 = vrot.slane %v1444, %v1472
    %v1609 = vunpack.c.l.b16 %v1316
    %v1610 = vunpack.c.h.b16 %v1316
    %v1611 = vunpack.c.l.b16 %v1317
    %v1612 = vunpack.c.h.b16 %v1317
    %v1613 = vunpack.c.l.b16 %v1318
    %v1614 = vunpack.c.h.b16 %v1318
    %v1615 = vunpack.c.l.b16 %v1319
    %v1616 = vunpack.c.l.b16 %v1320
    %v1617 = vunpack.c.h.b16 %v1320
    %v1618 = vunpack.c.l.b16 %v1321
    %v1619 = vunpack.c.h.b16 %v1321
    %v1620 = vunpack.c.l.b16 %v1322
    %v1621 = vunpack.c.h.b16 %v1322
    %v1622 = vunpack.c.l.b16 %v1323
    %v1623 = vunpack.c.l.b16 %v1324
    %v1624 = vunpack.c.h.b16 %v1324
    %v1625 = vunpack.c.l.b16 %v1325
    %v1626 = vunpack.c.h.b16 %v1325
    %v1627 = vunpack.c.l.b16 %v1326
    %v1628 = vunpack.c.h.b16 %v1326
    %v1629 = vunpack.c.l.b16 %v1327
    %v1630 = vunpack.c.l.b16 %v1328
    %v1631 = vunpack.c.h.b16 %v1328
    %v1632 = vunpack.c.l.b16 %v1329
    %v1633 = vunpack.c.h.b16 %v1329
    %v1634 = vunpack.c.l.b16 %v1330
    %v1635 = vunpack.c.h.b16 %v1330
    %v1636 = vunpack.c.l.b16 %v1331
    %v1637 = vunpack.c.l.b16 %v1332
    %v1638 = vunpack.c.h.b16 %v1332
    %v1639 = vunpack.c.l.b16 %v1333
    %v1640 = vunpack.c.h.b16 %v1333
    %v1641 = vunpack.c.l.b16 %v1334
    %v1642 = vunpack.c.h.b16 %v1334
    %v1643 = vunpack.c.l.b16 %v1335
    %v1644 = vunpack.c.l.b16 %v1336
    %v1645 = vunpack.c.h.b16 %v1336
    %v1646 = vunpack.c.l.b16 %v1337
    %v1647 = vunpack.c.h.b16 %v1337
    %v1648 = vunpack.c.l.b16 %v1338
    %v1649 = vunpack.c.h.b16 %v1338
    %v1650 = vunpack.c.l.b16 %v1339
    %v1651 = vunpack.c.l.b16 %v1340
    %v1652 = vunpack.c.h.b16 %v1340
    %v1653 = vunpack.c.l.b16 %v1341
    %v1654 = vunpack.c.h.b16 %v1341
    %v1655 = vunpack.c.l.b16 %v1342
    %v1656 = vunpack.c.h.b16 %v1342
    %v1657 = vunpack.c.l.b16 %v1343
    %v1658 = vunpack.c.l.b16 %v1344
    %v1659 = vunpack.c.h.b16 %v1344
    %v1660 = vunpack.c.l.b16 %v1345
    %v1661 = vunpack.c.h.b16 %v1345
    %v1662 = vunpack.c.l.b16 %v1346
    %v1663 = vunpack.c.h.b16 %v1346
    %v1664 = vunpack.c.l.b16 %v1347
    %v1665 = vunpack.c.l.b16 %v1348
    %v1666 = vunpack.c.h.b16 %v1348
    %v1667 = vunpack.c.l.b16 %v1349
    %v1668 = vunpack.c.h.b16 %v1349
    %v1669 = vunpack.c.l.b16 %v1350
    %v1670 = vunpack.c.h.b16 %v1350
    %v1671 = vunpack.c.l.b16 %v1351
    %v1672 = vunpack.c.l.b16 %v1352
    %v1673 = vunpack.c.h.b16 %v1352
    %v1674 = vunpack.c.l.b16 %v1353
    %v1675 = vunpack.c.h.b16 %v1353
    %v1676 = vunpack.c.l.b16 %v1354
    %v1677 = vunpack.c.h.b16 %v1354
    %v1678 = vunpack.c.l.b16 %v1355
    %v1679 = vunpack.c.l.b16 %v1356
    %v1680 = vunpack.c.h.b16 %v1356
    %v1681 = vunpack.c.l.b16 %v1357
    %v1682 = vunpack.c.h.b16 %v1357
    %v1683 = vunpack.c.l.b16 %v1358
    %v1684 = vunpack.c.h.b16 %v1358
    %v1685 = vunpack.c.l.b16 %v1359
    %v1686 = vunpack.c.l.b16 %v1360
    %v1687 = vunpack.c.h.b16 %v1360
    %v1688 = vunpack.c.l.b16 %v1361
    %v1689 = vunpack.c.h.b16 %v1361
    %v1690 = vunpack.c.l.b16 %v1362
    %v1691 = vunpack.c.h.b16 %v1362
    %v1692 = vunpack.c.l.b16 %v1363
    %v1693 = vunpack.c.l.b16 %v1364
    %v1694 = vunpack.c.h.b16 %v1364
    %v1695 = vunpack.c.l.b16 %v1365
    %v1696 = vunpack.c.h.b16 %v1365
    %v1697 = vunpack.c.l.b16 %v1366
    %v1698 = vunpack.c.h.b16 %v1366
    %v1699 = vunpack.c.l.b16 %v1367
    %v1700 = vunpack.c.l.b16 %v1368
    %v1701 = vunpack.c.h.b16 %v1368
    %v1702 = vunpack.c.l.b16 %v1369
    %v1703 = vunpack.c.h.b16 %v1369
    %v1704 = vunpack.c.l.b16 %v1370
    %v1705 = vunpack.c.h.b16 %v1370
    %v1706 = vunpack.c.l.b16 %v1371
    %v1707 = vunpack.c.l.b16 %v1372
    %v1708 = vunpack.c.h.b16 %v1372
    %v1709 = vunpack.c.l.b16 %v1373
    %v1710 = vunpack.c.h.b16 %v1373
    %v1711 = vunpack.c.l.b16 %v1374
    %v1712 = vunpack.c.h.b16 %v1374
    %v1713 = vunpack.c.l.b16 %v1375
    %v1714 = vunpack.c.l.b16 %v1376
    %v1715 = vunpack.c.h.b16 %v1376
    %v1716 = vunpack.c.l.b16 %v1377
    %v1717 = vunpack.c.h.b16 %v1377
    %v1718 = vunpack.c.l.b16 %v1378
    %v1719 = vunpack.c.h.b16 %v1378
    %v1720 = vunpack.c.l.b16 %v1379
    %v1721 = vunpack.c.l.b16 %v1380
    %v1722 = vunpack.c.h.b16 %v1380
    %v1723 = vunpack.c.l.b16 %v1381
    %v1724 = vunpack.c.h.b16 %v1381
    %v1725 = vunpack.c.l.b16 %v1382
    %v1726 = vunpack.c.h.b16 %v1382
    %v1727 = vunpack.c.l.b16 %v1383
    %v1728 = vunpack.c.l.b16 %v1384
    %v1729 = vunpack.c.h.b16 %v1384
    %v1730 = vunpack.c.l.b16 %v1385
    %v1731 = vunpack.c.h.b16 %v1385
    %v1732 = vunpack.c.l.b16 %v1386
    %v1733 = vunpack.c.h.b16 %v1386
    %v1734 = vunpack.c.l.b16 %v1387
    %v1735 = vunpack.c.l.b16 %v1388
    %v1736 = vunpack.c.h.b16 %v1388
    %v1737 = vunpack.c.l.b16 %v1389
    %v1738 = vunpack.c.h.b16 %v1389
    %v1739 = vunpack.c.l.b16 %v1390
    %v1740 = vunpack.c.h.b16 %v1390
    %v1741 = vunpack.c.l.b16 %v1391
    %v1742 = vunpack.c.l.b16 %v1392
    %v1743 = vunpack.c.h.b16 %v1392
    %v1744 = vunpack.c.l.b16 %v1393
    %v1745 = vunpack.c.h.b16 %v1393
    %v1746 = vunpack.c.l.b16 %v1394
    %v1747 = vunpack.c.h.b16 %v1394
    %v1748 = vunpack.c.l.b16 %v1395
    %v1749 = vunpack.c.l.b16 %v1396
    %v1750 = vunpack.c.h.b16 %v1396
    %v1751 = vunpack.c.l.b16 %v1397
    %v1752 = vunpack.c.h.b16 %v1397
    %v1753 = vunpack.c.l.b16 %v1398
    %v1754 = vunpack.c.h.b16 %v1398
    %v1755 = vunpack.c.l.b16 %v1399
    %v1756 = vunpack.c.l.b16 %v1400
    %v1757 = vunpack.c.h.b16 %v1400
    %v1758 = vunpack.c.l.b16 %v1401
    %v1759 = vunpack.c.h.b16 %v1401
    %v1760 = vunpack.c.l.b16 %v1402
    %v1761 = vunpack.c.h.b16 %v1402
    %v1762 = vunpack.c.l.b16 %v1403
    %v1763 = vunpack.c.l.b16 %v1404
    %v1764 = vunpack.c.h.b16 %v1404
    %v1765 = vunpack.c.l.b16 %v1405
    %v1766 = vunpack.c.h.b16 %v1405
    %v1767 = vunpack.c.l.b16 %v1406
    %v1768 = vunpack.c.h.b16 %v1406
    %v1769 = vunpack.c.l.b16 %v1407
    %v1770 = vunpack.c.l.b16 %v1408
    %v1771 = vunpack.c.h.b16 %v1408
    %v1772 = vunpack.c.l.b16 %v1409
    %v1773 = vunpack.c.h.b16 %v1409
    %v1774 = vunpack.c.l.b16 %v1410
    %v1775 = vunpack.c.h.b16 %v1410
    %v1776 = vunpack.c.l.b16 %v1411
    %v1777 = vunpack.c.l.b16 %v1412
    %v1778 = vunpack.c.h.b16 %v1412
    %v1779 = vunpack.c.l.b16 %v1413
    %v1780 = vunpack.c.h.b16 %v1413
    %v1781 = vunpack.c.l.b16 %v1414
    %v1782 = vunpack.c.h.b16 %v1414
    %v1783 = vunpack.c.l.b16 %v1415
    %v1784 = vunpack.c.l.b16 %v1416
    %v1785 = vunpack.c.h.b16 %v1416
    %v1786 = vunpack.c.l.b16 %v1417
    %v1787 = vunpack.c.h.b16 %v1417
    %v1788 = vunpack.c.l.b16 %v1418
    %v1789 = vunpack.c.h.b16 %v1418
    %v1790 = vunpack.c.l.b16 %v1419
    %v1791 = vunpack.c.l.b16 %v1420
    %v1792 = vunpack.c.h.b16 %v1420
    %v1793 = vunpack.c.l.b16 %v1421
    %v1794 = vunpack.c.h.b16 %v1421
    %v1795 = vunpack.c.l.b16 %v1422
    %v1796 = vunpack.c.h.b16 %v1422
    %v1797 = vunpack.c.l.b16 %v1423
    %v1798 = vunpack.c.l.b16 %v1424
    %v1799 = vunpack.c.h.b16 %v1424
    %v1800 = vunpack.c.l.b16 %v1425
    %v1801 = vunpack.c.h.b16 %v1425
    %v1802 = vunpack.c.l.b16 %v1426
    %v1803 = vunpack.c.h.b16 %v1426
    %v1804 = vunpack.c.l.b16 %v1427
    %v1805 = vunpack.c.l.b16 %v1428
    %v1806 = vunpack.c.h.b16 %v1428
    %v1807 = vunpack.c.l.b16 %v1429
    %v1808 = vunpack.c.h.b16 %v1429
    %v1809 = vunpack.c.l.b16 %v1430
    %v1810 = vunpack.c.h.b16 %v1430
    %v1811 = vunpack.c.l.b16 %v1431
    %v1812 = vunpack.c.l.b16 %v1432
    %v1813 = vunpack.c.h.b16 %v1432
    %v1814 = vunpack.c.l.b16 %v1433
    %v1815 = vunpack.c.h.b16 %v1433
    %v1816 = vunpack.c.l.b16 %v1434
    %v1817 = vunpack.c.h.b16 %v1434
    %v1818 = vunpack.c.l.b16 %v1435
    %v1819 = vunpack.c.l.b16 %v1436
    %v1820 = vunpack.c.h.b16 %v1436
    %v1821 = vunpack.c.l.b16 %v1437
    %v1822 = vunpack.c.h.b16 %v1437
    %v1823 = vunpack.c.l.b16 %v1438
    %v1824 = vunpack.c.h.b16 %v1438
    %v1825 = vunpack.c.l.b16 %v1439
    %v1826 = vunpack.c.l.b16 %v1440
    %v1827 = vunpack.c.h.b16 %v1440
    %v1828 = vunpack.c.l.b16 %v1441
    %v1829 = vunpack.c.h.b16 %v1441
    %v1830 = vunpack.c.l.b16 %v1442
    %v1831 = vunpack.c.h.b16 %v1442
    %v1832 = vunpack.c.l.b16 %v1443
    %v1833 = vpack.c.b16 %v1616, %v1609
    %v1834 = vpack.c.b16 %v1617, %v1610
    %v1835 = vpack.c.b16 %v1618, %v1611
    %v1836 = vpack.c.b16 %v1619, %v1612
    %v1837 = vpack.c.b16 %v1620, %v1613
    %v1838 = vpack.c.b16 %v1621, %v1614
    %v1839 = vpack.c.b16 %v1622, %v1615
    %v1840 = vpack.c.b16 %v1630, %v1623
    %v1841 = vpack.c.b16 %v1631, %v1624
    %v1842 = vpack.c.b16 %v1632, %v1625
    %v1843 = vpack.c.b16 %v1633, %v1626
    %v1844 = vpack.c.b16 %v1634, %v1627
    %v1845 = vpack.c.b16 %v1635, %v1628
    %v1846 = vpack.c.b16 %v1636, %v1629
    %v1847 = vpack.c.b16 %v1644, %v1637
    %v1848 = vpack.c.b16 %v1645, %v1638
    %v1849 = vpack.c.b16 %v1646, %v1639
    %v1850 = vpack.c.b16 %v1647, %v1640
    %v1851 = vpack.c.b16 %v1648, %v1641
    %v1852 = vpack.c.b16 %v1649, %v1642
    %v1853 = vpack.c.b16 %v1650, %v1643
    %v1854 = vpack.c.b16 %v1658, %v1651
    %v1855 = vpack.c.b16 %v1659, %v1652
    %v1856 = vpack.c.b16 %v1660, %v1653
    %v1857 = vpack.c.b16 %v1661, %v1654
    %v1858 = vpack.c.b16 %v1662, %v1655
    %v1859 = vpack.c.b16 %v1663, %v1656
    %v1860 = vpack.c.b16 %v1664, %v1657
    %v1861 = vpack.c.b16 %v1672, %v1665
    %v1862 = vpack.c.b16 %v1673, %v1666
    %v1863 = vpack.c.b16 %v1674, %v1667
    %v1864 = vpack.c.b16 %v1675, %v1668
    %v1865 = vpack.c.b16 %v1676, %v1669
    %v1866 = vpack.c.b16 %v1677, %v1670
    %v1867 = vpack.c.b16 %v1678, %v1671
    %v1868 = vpack.c.b16 %v1686, %v1679
    %v1869 = vpack.c.b16 %v1687, %v1680
    %v1870 = vpack.c.b16 %v1688, %v1681
    %v1871 = vpack.c.b16 %v1689, %v1682
    %v1872 = vpack.c.b16 %v1690, %v1683
    %v1873 = vpack.c.b16 %v1691, %v1684
    %v1874 = vpack.c.b16 %v1692, %v1685
    %v1875 = vpack.c.b16 %v1700, %v1693
    %v1876 = vpack.c.b16 %v1701, %v1694
    %v1877 = vpack.c.b16 %v1702, %v1695
    %v1878 = vpack.c.b16 %v1703, %v1696
    %v1879 = vpack.c.b16 %v1704, %v1697
    %v1880 = vpack.c.b16 %v1705, %v1698
    %v1881 = vpack.c.b16 %v1706, %v1699
    %v1882 = vpack.c.b16 %v1714, %v1707
    %v1883 = vpack.c.b16 %v1715, %v1708
    %v1884 = vpack.c.b16 %v1716, %v1709
    %v1885 = vpack.c.b16 %v1717, %v1710
    %v1886 = vpack.c.b16 %v1718, %v1711
    %v1887 = vpack.c.b16 %v1719, %v1712
    %v1888 = vpack.c.b16 %v1720, %v1713
    %v1889 = vpack.c.b16 %v1728, %v1721
    %v1890 = vpack.c.b16 %v1729, %v1722
    %v1891 = vpack.c.b16 %v1730, %v1723
    %v1892 = vpack.c.b16 %v1731, %v1724
    %v1893 = vpack.c.b16 %v1732, %v1725
    %v1894 = vpack.c.b16 %v1733, %v1726
    %v1895 = vpack.c.b16 %v1734, %v1727
    %v1896 = vpack.c.b16 %v1742, %v1735
    %v1897 = vpack.c.b16 %v1743, %v1736
    %v1898 = vpack.c.b16 %v1744, %v1737
    %v1899 = vpack.c.b16 %v1745, %v1738
    %v1900 = vpack.c.b16 %v1746, %v1739
    %v1901 = vpack.c.b16 %v1747, %v1740
    %v1902 = vpack.c.b16 %v1748, %v1741
    %v1903 = vpack.c.b16 %v1756, %v1749
    %v1904 = vpack.c.b16 %v1757, %v1750
    %v1905 = vpack.c.b16 %v1758, %v1751
    %v1906 = vpack.c.b16 %v1759, %v1752
    %v1907 = vpack.c.b16 %v1760, %v1753
    %v1908 = vpack.c.b16 %v1761, %v1754
    %v1909 = vpack.c.b16 %v1762, %v1755
    %v1910 = vpack.c.b16 %v1770, %v1763
    %v1911 = vpack.c.b16 %v1771, %v1764
    %v1912 = vpack.c.b16 %v1772, %v1765
    %v1913 = vpack.c.b16 %v1773, %v1766
    %v1914 = vpack.c.b16 %v1774, %v1767
    %v1915 = vpack.c.b16 %v1775, %v1768
    %v1916 = vpack.c.b16 %v1776, %v1769
    %v1917 = vpack.c.b16 %v1784, %v1777
    %v1918 = vpack.c.b16 %v1785, %v1778
    %v1919 = vpack.c.b16 %v1786, %v1779
    %v1920 = vpack.c.b16 %v1787, %v1780
    %v1921 = vpack.c.b16 %v1788, %v1781
    %v1922 = vpack.c.b16 %v1789, %v1782
    %v1923 = vpack.c.b16 %v1790, %v1783
    %v1924 = vpack.c.b16 %v1798, %v1791
    %v1925 = vpack.c.b16 %v1799, %v1792
    %v1926 = vpack.c.b16 %v1800, %v1793
    %v1927 = vpack.c.b16 %v1801, %v1794
    %v1928 = vpack.c.b16 %v1802, %v1795
    %v1929 = vpack.c.b16 %v1803, %v1796
    %v1930 = vpack.c.b16 %v1804, %v1797
    %v1931 = vpack.c.b16 %v1812, %v1805
    %v1932 = vpack.c.b16 %v1813, %v1806
    %v1933 = vpack.c.b16 %v1814, %v1807
    %v1934 = vpack.c.b16 %v1815, %v1808
    %v1935 = vpack.c.b16 %v1816, %v1809
    %v1936 = vpack.c.b16 %v1817, %v1810
    %v1937 = vpack.c.b16 %v1818, %v1811
    %v1938 = vpack.c.b16 %v1826, %v1819
    %v1939 = vpack.c.b16 %v1827, %v1820
    %v1940 = vpack.c.b16 %v1828, %v1821
    %v1941 = vpack.c.b16 %v1829, %v1822
    %v1942 = vpack.c.b16 %v1830, %v1823
    %v1943 = vpack.c.b16 %v1831, %v1824
    %v1944 = vpack.c.b16 %v1832, %v1825
    %2057 = vmatprep.subr.bf16.mxu0 %v1834
    %2058 = vmatpush1.bf16.msra.mxu0 %v1833
    %2059 = vmatprep.subr.bf16.mxu0 %v1841
    %2060 = vmatpush1.bf16.msra.mxu0 %v1840
    %2061 = vmatprep.subr.bf16.mxu0 %v1848
    %2062 = vmatpush1.bf16.msra.mxu0 %v1847
    %2063 = vmatprep.subr.bf16.mxu0 %v1855
    %2064 = vmatpush1.bf16.msra.mxu0 %v1854
    %2065 = vmatprep.subr.bf16.mxu0 %v1862
    %2066 = vmatpush1.bf16.msra.mxu0 %v1861
    %2067 = vmatprep.subr.bf16.mxu0 %v1869
    %2068 = vmatpush1.bf16.msra.mxu0 %v1868
    %2069 = vmatprep.subr.bf16.mxu0 %v1876
    %2070 = vmatpush1.bf16.msra.mxu0 %v1875
    %2071 = vmatprep.subr.bf16.mxu0 %v1883
    %2072 = vmatpush1.bf16.msra.mxu0 %v1882
    %2073 = vmatprep.subr.bf16.mxu0 %v1890
    %2074 = vmatpush1.bf16.msra.mxu0 %v1889
    %2075 = vmatprep.subr.bf16.mxu0 %v1897
    %2076 = vmatpush1.bf16.msra.mxu0 %v1896
    %2077 = vmatprep.subr.bf16.mxu0 %v1904
    %2078 = vmatpush1.bf16.msra.mxu0 %v1903
    %2079 = vmatprep.subr.bf16.mxu0 %v1911
    %2080 = vmatpush1.bf16.msra.mxu0 %v1910
    %2081 = vmatprep.subr.bf16.mxu0 %v1918
    %2082 = vmatpush1.bf16.msra.mxu0 %v1917
    %2083 = vmatprep.subr.bf16.mxu0 %v1925
    %2084 = vmatpush1.bf16.msra.mxu0 %v1924
    %2085 = vmatprep.subr.bf16.mxu0 %v1932
    %2086 = vmatpush1.bf16.msra.mxu0 %v1931
    %2087 = vmatprep.subr.bf16.mxu0 %v1939
    %2088 = vmatpush1.bf16.msra.mxu0 %v1938
    %2089 = vmatprep.mubr.bf16.mxu0 %v1315
    %2090 = vmatmul.mubr.bf16.gmra.mrb[0].mxu0 %v1314
    %v2091 = vpop.f32.mrb[0].mxu0
    %v2092 = vadd.f32 %v1449, %v2091
    %v2093 = vpop.f32.mrb[0].mxu0
    %v2094 = vadd.f32 %v1453, %v2093
    %v2095 = vpop.f32.mrb[0].mxu0
    %v2096 = vpop.f32.mrb[0].mxu0
    %2097 = vdwg.mxu0
    %2098 = vmatprep.subr.bf16.mxu0 %v1836
    %2099 = vmatpush1.bf16.msra.mxu0 %v1835
    %2100 = vmatprep.subr.bf16.mxu0 %v1843
    %2101 = vmatpush1.bf16.msra.mxu0 %v1842
    %2102 = vmatprep.subr.bf16.mxu0 %v1850
    %2103 = vmatpush1.bf16.msra.mxu0 %v1849
    %2104 = vmatprep.subr.bf16.mxu0 %v1857
    %2105 = vmatpush1.bf16.msra.mxu0 %v1856
    %2106 = vmatprep.subr.bf16.mxu0 %v1864
    %2107 = vmatpush1.bf16.msra.mxu0 %v1863
    %2108 = vmatprep.subr.bf16.mxu0 %v1871
    %2109 = vmatpush1.bf16.msra.mxu0 %v1870
    %2110 = vmatprep.subr.bf16.mxu0 %v1878
    %2111 = vmatpush1.bf16.msra.mxu0 %v1877
    %2112 = vmatprep.subr.bf16.mxu0 %v1885
    %2113 = vmatpush1.bf16.msra.mxu0 %v1884
    %2114 = vmatprep.subr.bf16.mxu0 %v1892
    %2115 = vmatpush1.bf16.msra.mxu0 %v1891
    %2116 = vmatprep.subr.bf16.mxu0 %v1899
    %2117 = vmatpush1.bf16.msra.mxu0 %v1898
    %2118 = vmatprep.subr.bf16.mxu0 %v1906
    %2119 = vmatpush1.bf16.msra.mxu0 %v1905
    %2120 = vmatprep.subr.bf16.mxu0 %v1913
    %2121 = vmatpush1.bf16.msra.mxu0 %v1912
    %2122 = vmatprep.subr.bf16.mxu0 %v1920
    %2123 = vmatpush1.bf16.msra.mxu0 %v1919
    %2124 = vmatprep.subr.bf16.mxu0 %v1927
    %2125 = vmatpush1.bf16.msra.mxu0 %v1926
    %2126 = vmatprep.subr.bf16.mxu0 %v1934
    %2127 = vmatpush1.bf16.msra.mxu0 %v1933
    %2128 = vmatprep.subr.bf16.mxu0 %v1941
    %2129 = vmatpush1.bf16.msra.mxu0 %v1940
    %2130 = vmatprep.mubr.bf16.mxu0 %v1315
    %2131 = vmatmul.mubr.bf16.gmra.mrb[0].mxu0 %v1314
    %v2132 = vpop.f32.mrb[0].mxu0
    %v2133 = vadd.f32 %v1457, %v2132
    %v2134 = vpop.f32.mrb[0].mxu0
    %v2135 = vadd.f32 %v1461, %v2134
    %v2136 = vpop.f32.mrb[0].mxu0
    %v2137 = vpop.f32.mrb[0].mxu0
    %2138 = vdwg.mxu0
    %2139 = vmatprep.subr.bf16.mxu0 %v1838
    %2140 = vmatpush1.bf16.msra.mxu0 %v1837
    %2141 = vmatprep.subr.bf16.mxu0 %v1845
    %2142 = vmatpush1.bf16.msra.mxu0 %v1844
    %2143 = vmatprep.subr.bf16.mxu0 %v1852
    %2144 = vmatpush1.bf16.msra.mxu0 %v1851
    %2145 = vmatprep.subr.bf16.mxu0 %v1859
    %2146 = vmatpush1.bf16.msra.mxu0 %v1858
    %2147 = vmatprep.subr.bf16.mxu0 %v1866
    %2148 = vmatpush1.bf16.msra.mxu0 %v1865
    %2149 = vmatprep.subr.bf16.mxu0 %v1873
    %2150 = vmatpush1.bf16.msra.mxu0 %v1872
    %2151 = vmatprep.subr.bf16.mxu0 %v1880
    %2152 = vmatpush1.bf16.msra.mxu0 %v1879
    %2153 = vmatprep.subr.bf16.mxu0 %v1887
    %2154 = vmatpush1.bf16.msra.mxu0 %v1886
    %2155 = vmatprep.subr.bf16.mxu0 %v1894
    %2156 = vmatpush1.bf16.msra.mxu0 %v1893
    %2157 = vmatprep.subr.bf16.mxu0 %v1901
    %2158 = vmatpush1.bf16.msra.mxu0 %v1900
    %2159 = vmatprep.subr.bf16.mxu0 %v1908
    %2160 = vmatpush1.bf16.msra.mxu0 %v1907
    %2161 = vmatprep.subr.bf16.mxu0 %v1915
    %2162 = vmatpush1.bf16.msra.mxu0 %v1914
    %2163 = vmatprep.subr.bf16.mxu0 %v1922
    %2164 = vmatpush1.bf16.msra.mxu0 %v1921
    %2165 = vmatprep.subr.bf16.mxu0 %v1929
    %2166 = vmatpush1.bf16.msra.mxu0 %v1928
    %2167 = vmatprep.subr.bf16.mxu0 %v1936
    %2168 = vmatpush1.bf16.msra.mxu0 %v1935
    %2169 = vmatprep.subr.bf16.mxu0 %v1943
    %2170 = vmatpush1.bf16.msra.mxu0 %v1942
    %2171 = vmatprep.mubr.bf16.mxu0 %v1315
    %2172 = vmatmul.mubr.bf16.gmra.mrb[0].mxu0 %v1314
    %v2173 = vpop.f32.mrb[0].mxu0
    %v2174 = vadd.f32 %v1465, %v2173
    %v2175 = vpop.f32.mrb[0].mxu0
    %v2176 = vadd.f32 %v1469, %v2175
    %v2177 = vpop.f32.mrb[0].mxu0
    %v2178 = vpop.f32.mrb[0].mxu0
    %2179 = vdwg.mxu0
    %2180 = vmatprep.subr.bf16.mxu0 0
    %2181 = vmatpush1.bf16.msra.mxu0 %v1839
    %2182 = vmatprep.subr.bf16.mxu0 0
    %2183 = vmatpush1.bf16.msra.mxu0 %v1846
    %2184 = vmatprep.subr.bf16.mxu0 0
    %2185 = vmatpush1.bf16.msra.mxu0 %v1853
    %2186 = vmatprep.subr.bf16.mxu0 0
    %2187 = vmatpush1.bf16.msra.mxu0 %v1860
    %2188 = vmatprep.subr.bf16.mxu0 0
    %2189 = vmatpush1.bf16.msra.mxu0 %v1867
    %2190 = vmatprep.subr.bf16.mxu0 0
    %2191 = vmatpush1.bf16.msra.mxu0 %v1874
    %2192 = vmatprep.subr.bf16.mxu0 0
    %2193 = vmatpush1.bf16.msra.mxu0 %v1881
    %2194 = vmatprep.subr.bf16.mxu0 0
    %2195 = vmatpush1.bf16.msra.mxu0 %v1888
    %2196 = vmatprep.subr.bf16.mxu0 0
    %2197 = vmatpush1.bf16.msra.mxu0 %v1895
    %2198 = vmatprep.subr.bf16.mxu0 0
    %2199 = vmatpush1.bf16.msra.mxu0 %v1902
    %2200 = vmatprep.subr.bf16.mxu0 0
    %2201 = vmatpush1.bf16.msra.mxu0 %v1909
    %2202 = vmatprep.subr.bf16.mxu0 0
    %2203 = vmatpush1.bf16.msra.mxu0 %v1916
    %2204 = vmatprep.subr.bf16.mxu0 0
    %2205 = vmatpush1.bf16.msra.mxu0 %v1923
    %2206 = vmatprep.subr.bf16.mxu0 0
    %2207 = vmatpush1.bf16.msra.mxu0 %v1930
    %2208 = vmatprep.subr.bf16.mxu0 0
    %2209 = vmatpush1.bf16.msra.mxu0 %v1937
    %2210 = vmatprep.subr.bf16.mxu0 0
    %2211 = vmatpush1.bf16.msra.mxu0 %v1944
    %2212 = vmatprep.mubr.bf16.mxu0 %v1315
    %2213 = vmatmul.mubr.bf16.gmra.mrb[0].mxu0 %v1314
    %v2214 = vpop.f32.mrb[0].mxu0
    %v2215 = vadd.f32 %v1473, %v2214
    %v2216 = vpop.f32.mrb[0].mxu0
    %v2217 = vpop.f32.mrb[0].mxu0
    %v2218 = vpop.f32.mrb[0].mxu0
    %2219 = vdwg.mxu0
    %2220 = vst [vmem:[%s12] sm:$0xff] %v1150
    %2221 = vst [vmem:[%s12 + $0x8] sm:$0xff] %v1152
    %2222 = vst [vmem:[#allocation2] sm:$0xff] %v2092
    %2223 = vst [vmem:[#allocation2 + $0x8] sm:$0xff] %v2094
    %2224 = vst [vmem:[#allocation2 + $0x10] sm:$0xff] %v2133
    %2225 = vst [vmem:[#allocation2 + $0x18] sm:$0xff] %v2135
    %2226 = vst [vmem:[#allocation2 + $0x20] sm:$0xff] %v2174
    %2227 = vst [vmem:[#allocation2 + $0x28] sm:$0xff] %v2176
    %2228 = vst.msk [vmem:[#allocation2 + $0x30] sm:$0xff] %vm659, %v2215
    // Predicated region
    $region50: #{vae_forward.1} parent=1 // pred_check
      _
    $region51: #{vae_forward.1} parent=1 // pred_check_branch
      %2230 = sbr.rel (0) target = $region53
    $region52: #{vae_forward.1} parent=1 // pred_region
      _
    $region53: #{vae_forward.1} parent=1 // pred_fallthru
      _
    // Predicated region
    $region54: #{vae_forward.1} parent=1 // pred_check
      _
    $region55: #{vae_forward.1} parent=1 // pred_check_branch
      %2232 = sbr.rel (0) target = $region57
    $region56: #{vae_forward.1} parent=1 // pred_region
      %s2234 = ssub.s32 896, 896
      %2235 = vsyncadd [#allocation3], %s2234
      %s2237 = sshll.u32 [#allocation2], 4
      %s2238 = int_to_ptr.vmem [resolvable:$true] %s2237
      %2240 = dma.vmem_to_hbm [thread:$0]  %s2238, 896, %s13, [#allocation3]
    $region57: #{vae_forward.1} parent=1 // pred_fallthru
      _
    // Predicated region
    $region58: #{vae_forward.1} parent=1 // pred_check
      _
    $region59: #{vae_forward.1} parent=1 // pred_check_branch
      %2242 = sbr.rel (0) target = $region61
    $region60: #{vae_forward.1} parent=1 // pred_region
      _
    $region61: #{vae_forward.1} parent=1 // pred_fallthru
      _
    // Predicated region
    $region62: #{vae_forward.1} parent=1 // pred_check
      _
    $region63: #{vae_forward.1} parent=1 // pred_check_branch
      %2244 = sbr.rel (0) target = $region65
    $region64: #{vae_forward.1} parent=1 // pred_region
      %2245 = dma.done [#allocation3], 896
    $region65: #{vae_forward.1} parent=1 // pred_fallthru
      _
    %2246 = vsyncpa [#allocation3], 1

</llo_original>
